<compile_context>
chip_gen: v6e
topology: v6e:2x2x1
jax: 0.10.0
libtpu: 0.0.40
codegen_flags: <defaults>
</compile_context>

<pallas_src>
import functools

import jax
import jax.numpy as jnp
from jax.experimental import pallas as pl
from jax.experimental.pallas import tpu as pltpu


_EPS_NORM = 1e-5                    # feature-normalization epsilon
_EPS_REL = 1e-3                     # relative-distance epsilon
_EPS_SUM = 1e-6                     # sum-normalize epsilon
_BIAS = 1.0
_INV_SIGMA = 1.0 / (0.5 + 1e-5)     # 1 / (nn_stretch_sigma + eps)


# -----------------------------------------------------------------------------
# Hardware introspection (generation-aware tiling / dtype choices).
# -----------------------------------------------------------------------------
def _device_kind():
    try:
        return jax.devices()[0].device_kind.lower()
    except Exception:
        return ""


def _use_bf16_exp(kind):
    # bf16 EUP exists on v6e / v7x; v5e (and older) must run exp in f32.
    return ("v6" in kind) or ("v7" in kind) or ("7x" in kind)


def _vmem_capacity_bytes(kind):
    try:
        cap = int(pltpu.get_tpu_info().vmem_capacity_bytes)
        if cap > 0:
            return cap
    except Exception:
        pass
    if ("v5" in kind) or ("v6" in kind):
        return 128 << 20
    return 64 << 20                  # conservative default (v7x per-TC VMEM)


def _pick_tile_g(hw, c, vmem_cap, max_tile_g):
    """Largest lane-aligned (multiple-of-128) divisor of `hw` whose working
    set stays within a fraction of this generation's VMEM."""
    if hw <= 128 or hw % 128 != 0:
        return hw                    # toy / ragged spatial extent: single tile
    fixed = 2 * hw * c * 2 + hw * 512 + (2 << 20)   # tar slab x2 + row-max scratch
    budget = int(vmem_cap * 0.75)
    best = 128
    t = 128
    cap = max(128, min(hw, max_tile_g))
    while t <= cap:
        if hw % t == 0:
            need = fixed + 2 * c * t * 2 + 4 * hw * t * 4
            if need <= budget:
                best = t
        t += 128
    return best


# -----------------------------------------------------------------------------
# Pallas kernel: streaming mrf_loss on pre-normalized features.
# grid = (B, HW // tile_g); b "parallel", g "arbitrary".
#   tar_ref : (1, HW, C)  bf16  normalized tar, transposed (matmul LHS)
#   gen_ref : (1, C, TG)  bf16  normalized gen column tile (matmul RHS)
#   out_ref : (1, 1, 1)   f32   per-batch partial loss
#   row_max : (HW, 1)     f32   running per-tar-patch max of cs
# -----------------------------------------------------------------------------
def _mrf_loss_kernel(tar_ref, gen_ref, out_ref, row_max_ref, *, use_bf16_exp):
    g = pl.program_id(1)
    n_g = pl.num_programs(1)

    # cs values are always >= 0, so zero-init of the running max is safe.
    @pl.when(g == 0)
    def _():
        row_max_ref[...] = jnp.zeros_like(row_max_ref)

    # ---- cosine similarity block on the MXU: (HW, C) x (C, TG) -> (HW, TG) --
    cos = jnp.dot(tar_ref[0], gen_ref[0],
                  preferred_element_type=jnp.float32)

    # ---- fused d01 -> relative-distance -> exp -------------------------------
    # d01 = 0.5 - 0.5*cos ; div = per-column min of d01 (conditionally + eps)
    # exp((bias - d01/div)/sigma) == exp(c1*cos + c0) with per-column c0, c1.
    d01_min = 0.5 - 0.5 * jnp.max(cos, axis=0, keepdims=True)      # (1, TG)
    div = jnp.where(d01_min < _EPS_REL, d01_min + _EPS_REL, d01_min)
    c1 = (0.5 * _INV_SIGMA) / div          # exact divide: error here amplifies
    c0 = _BIAS * _INV_SIGMA - c1
    z = cos * c1 + c0                                               # (HW, TG)
    if use_bf16_exp:                       # v6e / v7x: bf16 EUP, half VMEM for e
        e = jnp.exp(z.astype(jnp.bfloat16)).astype(jnp.float32)
    else:                                  # v5e: f32 EUP only
        e = jnp.exp(z)

    # ---- column-wise sum-normalize; fold per-row max into running scratch ---
    inv_sum = pl.reciprocal(jnp.sum(e, axis=0, keepdims=True) + _EPS_SUM,
                            approx=True)                            # (1, TG)
    tile_row_max = jnp.max(e * inv_sum, axis=1, keepdims=True)      # (HW, 1)
    row_max_ref[...] = jnp.maximum(row_max_ref[...], tile_row_max)

    # ---- finalize on the last gen-column tile --------------------------------
    @pl.when(g == n_g - 1)
    def _():
        div_mrf = jnp.maximum(jnp.mean(row_max_ref[...]), 1e-6)
        out_ref[...] = jnp.broadcast_to(-jnp.log(div_mrf), out_ref.shape)


def mrf_loss(gen, tar, *, max_tile_g=2048):
    """IDMRFLoss.mrf_loss for NCHW feature maps gen, tar: (B, C, H, W)."""
    B, C, H, W = gen.shape
    HW = H * W

    # ---- wrapper-side normalization (hoisted out of the kernel, f32 math) ---
    gen = gen.astype(jnp.float32)
    tar = tar.astype(jnp.float32)
    mean_t = jnp.mean(tar, axis=1, keepdims=True)
    gen_f = gen - mean_t
    tar_f = tar - mean_t
    gen_n = gen_f / (jnp.sqrt(jnp.sum(gen_f * gen_f, axis=1, keepdims=True))
                     + _EPS_NORM)
    tar_n = tar_f / (jnp.sqrt(jnp.sum(tar_f * tar_f, axis=1, keepdims=True))
                     + _EPS_NORM)

    # bf16 MXU operands; tar pre-transposed to (B, HW, C) so the kernel matmul
    # is a standard (M, K) x (K, N) contraction (no in-kernel transpose).
    g_slab = gen_n.reshape(B, C, HW).astype(jnp.bfloat16)           # (B, C, HW)
    t_slab = jnp.transpose(tar_n.reshape(B, C, HW),
                           (0, 2, 1)).astype(jnp.bfloat16)          # (B, HW, C)

    kind = _device_kind()
    use_bf16_exp = _use_bf16_exp(kind)
    vmem_cap = _vmem_capacity_bytes(kind)
    tile_g = _pick_tile_g(HW, C, vmem_cap, max_tile_g)
    n_g = HW // tile_g

    need = (2 * HW * C * 2          # tar (HW, C) bf16, double-buffered
            + 2 * C * tile_g * 2    # gen (C, tile_g) bf16, double-buffered
            + HW * 512              # (HW, 1) f32 row-max scratch (lane-padded)
            + 4 * HW * tile_g * 4   # (HW, tile_g) f32 elementwise temporaries
            + (4 << 20))            # headroom
    vmem_limit = min(max(need, 32 << 20), int(vmem_cap * 0.85))

    cost = pl.CostEstimate(
        flops=int(2 * B * C * HW * HW),
        transcendentals=int(B * HW * HW),
        bytes_accessed=int(2 * B * C * HW * 2 + B * 4))

    kernel = functools.partial(_mrf_loss_kernel, use_bf16_exp=use_bf16_exp)

    out = pl.pallas_call(
        kernel,
        out_shape=jax.ShapeDtypeStruct((B, 1, 1), jnp.float32),
        grid_spec=pltpu.PrefetchScalarGridSpec(
            num_scalar_prefetch=0,
            grid=(B, n_g),
            in_specs=[
                pl.BlockSpec((1, HW, C), lambda b, gi: (b, 0, 0)),       # tar^T
                pl.BlockSpec((1, C, tile_g), lambda b, gi: (b, 0, gi)),  # gen
            ],
            out_specs=pl.BlockSpec((1, 1, 1), lambda b, gi: (b, 0, 0)),
            scratch_shapes=[
                pltpu.VMEM((HW, 1), jnp.float32),   # running per-row max of cs
            ]),
        compiler_params=pltpu.CompilerParams(
            dimension_semantics=("parallel", "arbitrary"),
            vmem_limit_bytes=vmem_limit),
        cost_estimate=cost,
    )(t_slab, g_slab)
    return jnp.sum(out)


# -----------------------------------------------------------------------------
# Synthetic stand-in for VGG19FeatLayer (plain JAX glue, deterministic weights)
# -----------------------------------------------------------------------------
_FEAT_CFG = [
    ("conv1_1", 3, 4), ("conv1_2", 4, 4),
    ("conv2_1", 4, 8), ("conv2_2", 8, 8),
    ("conv3_1", 8, 16), ("conv3_2", 16, 16),
    ("conv3_3", 16, 16), ("conv3_4", 16, 16),
    ("conv4_1", 16, 32), ("conv4_2", 32, 32),
]


def init_feat_params(key):
    params = {}
    for name, cin, cout in _FEAT_CFG:
        key, sub = jax.random.split(key)
        w = jax.random.normal(sub, (cout, cin, 3, 3), jnp.float32)
        params[name] = w * (1.0 / jnp.sqrt(cin * 9.0))
    return params


def _conv(x, w):
    return jax.lax.conv_general_dilated(
        x, w, window_strides=(1, 1), padding="SAME",
        dimension_numbers=("NCHW", "OIHW", "NCHW"))


def _pool(x):
    return jax.lax.reduce_window(
        x, -jnp.inf, jax.lax.max, (1, 1, 2, 2), (1, 1, 2, 2), "VALID")


def feat_layer(x, params):
    relu = jax.nn.relu
    feats = {}
    h = relu(_conv(x, params["conv1_1"]))
    h = relu(_conv(h, params["conv1_2"]))
    h = _pool(h)
    h = relu(_conv(h, params["conv2_1"]))
    h = relu(_conv(h, params["conv2_2"]))
    feats["relu2_2"] = h
    h = _pool(h)
    h = relu(_conv(h, params["conv3_1"]))
    h = relu(_conv(h, params["conv3_2"]))
    feats["relu3_2"] = h
    h = relu(_conv(h, params["conv3_3"]))
    h = relu(_conv(h, params["conv3_4"]))
    h = _pool(h)
    h = relu(_conv(h, params["conv4_1"]))
    h = relu(_conv(h, params["conv4_2"]))
    feats["relu4_2"] = h
    return feats


# -----------------------------------------------------------------------------
# IDMRFLoss forward (shallow_feats=False):
#   style   = 1.0*mrf(relu3_2) + 1.0*mrf(relu4_2)
#   content = 1.0*mrf(relu4_2)
#   loss    = lambda_style*style + lambda_content*content
# -----------------------------------------------------------------------------
FEAT_STYLE_LAYERS = {"relu3_2": 1.0, "relu4_2": 1.0}
FEAT_CONTENT_LAYERS = {"relu4_2": 1.0}
LAMBDA_STYLE = 1.0
LAMBDA_CONTENT = 1.0


def idmrf_loss(gen, tar, params, *, max_tile_g=2048):
    gen_feats = feat_layer(gen, params)
    tar_feats = feat_layer(tar, params)
    style = sum(w * mrf_loss(gen_feats[l], tar_feats[l], max_tile_g=max_tile_g)
                for l, w in FEAT_STYLE_LAYERS.items())
    content = sum(w * mrf_loss(gen_feats[l], tar_feats[l], max_tile_g=max_tile_g)
                  for l, w in FEAT_CONTENT_LAYERS.items())
    return style * LAMBDA_STYLE + content * LAMBDA_CONTENT


# -----------------------------------------------------------------------------
# Pure-JAX f32 reference (matches the torch math; normalized features are
# quantized to bf16 to mirror the kernel's MXU operand precision).
# -----------------------------------------------------------------------------
def _mrf_loss_ref(gen, tar):
    gen = gen.astype(jnp.float32)
    tar = tar.astype(jnp.float32)
    B, C, H, W = gen.shape
    mean_t = jnp.mean(tar, axis=1, keepdims=True)
    gen_f, tar_f = gen - mean_t, tar - mean_t
    gen_n = gen_f / (jnp.sqrt(jnp.sum(gen_f * gen_f, axis=1, keepdims=True))
                     + _EPS_NORM)
    tar_n = tar_f / (jnp.sqrt(jnp.sum(tar_f * tar_f, axis=1, keepdims=True))
                     + _EPS_NORM)
    gen_n = gen_n.astype(jnp.bfloat16).astype(jnp.float32)
    tar_n = tar_n.astype(jnp.bfloat16).astype(jnp.float32)
    g2 = gen_n.reshape(B, C, H * W)
    t2 = tar_n.reshape(B, C, H * W)
    cos = jnp.einsum("bcj,bcp->bjp", t2, g2)          # (B, HW_tar, HW_gen)
    d01 = -(cos - 1.0) / 2.0
    div = jnp.min(d01, axis=1, keepdims=True)
    div = jnp.where(div < _EPS_REL, div + _EPS_REL, div)
    rel = d01 / div
    e = jnp.exp((_BIAS - rel) * _INV_SIGMA)
    cs = e / (jnp.sum(e, axis=1, keepdims=True) + _EPS_SUM)
    k_max = jnp.max(cs, axis=2)
    div_mrf = jnp.maximum(jnp.mean(k_max, axis=1), 1e-6)
    return jnp.sum(-jnp.log(div_mrf))


def idmrf_loss_ref(gen, tar, params):
    gen_feats = feat_layer(gen, params)
    tar_feats = feat_layer(tar, params)
    style = sum(w * _mrf_loss_ref(gen_feats[l], tar_feats[l])
                for l, w in FEAT_STYLE_LAYERS.items())
    content = sum(w * _mrf_loss_ref(gen_feats[l], tar_feats[l])
                  for l, w in FEAT_CONTENT_LAYERS.items())
    return style * LAMBDA_STYLE + content * LAMBDA_CONTENT


if __name__ == "__main__":
    key = jax.random.PRNGKey(0)
    k_params, k_gen, k_tar = jax.random.split(key, 3)

    params = init_feat_params(k_params)
    # (B, 3, 64, 64) -> relu3_2: (2, 16, 32, 32) [HW=1024], relu4_2: (2, 32, 16, 16).
    gen = jax.random.normal(k_gen, (2, 3, 64, 64), jnp.float32)
    tar = jax.random.normal(k_tar, (2, 3, 64, 64), jnp.float32)

    # max_tile_g=512 so relu3_2 exercises the multi-tile streaming path
    # (2 gen-column tiles); relu4_2 runs single-tile.
    loss_fn = jax.jit(idmrf_loss, static_argnames=("max_tile_g",))
    loss = loss_fn(gen, tar, params, max_tile_g=512)
    jax.block_until_ready(loss)

    ref = jax.jit(idmrf_loss_ref)(gen, tar, params)
    jax.block_until_ready(ref)

    assert loss.shape == () and bool(jnp.isfinite(loss)), float(loss)
    # bf16 MXU operands / bf16 exp (v6e+/v7x) / approx sum-reciprocal vs the
    # bf16-quantized f32 reference -> moderately loose tolerance.
    assert abs(float(loss) - float(ref)) <= 0.08 * abs(float(ref)) + 0.5, (
        float(loss), float(ref))
    print("KERNEL_OK")
</pallas_src>

<mosaic_0001>
module attributes {stable_mosaic.version = 11 : i64} {
  func.func @_mrf_loss_kernel(%arg0: i32, %arg1: i32, %arg2: memref<1x64x32xbf16, #tpu.memory_space<vmem>>, %arg3: memref<1x32x64xbf16, #tpu.memory_space<vmem>>, %arg4: memref<1x1x1xf32, #tpu.memory_space<vmem>>, %arg5: memref<64x1xf32, #tpu.memory_space<vmem>>) attributes {dimension_semantics = [#tpu.dimension_semantics<parallel>, #tpu.dimension_semantics<arbitrary>], iteration_bounds = array<i64: 2, 1>, scalar_prefetch = 0 : i64, scratch_operands = 1 : i64, tpu.core_type = #tpu.core_type<tc>, window_params = [{transform_indices = @transform_0, window_bounds = array<i64: 1, 64, 32>}, {transform_indices = @transform_1, window_bounds = array<i64: 1, 32, 64>}, {transform_indices = @transform_2, window_bounds = array<i64: 1, 1, 1>}]} {
    %c0_i32 = arith.constant 0 : i32
    %0 = arith.cmpi eq, %arg1, %c0_i32 : i32
    %1 = arith.extui %0 : i1 to i32
    %c0_i32_0 = arith.constant 0 : i32
    %2 = arith.cmpi ne, %1, %c0_i32_0 : i32
    scf.if %2 {
      %cst_22 = arith.constant 0.000000e+00 : f32
      %43 = vector.broadcast %cst_22 : f32 to vector<64x1xf32>
      %c0_23 = arith.constant 0 : index
      %c0_24 = arith.constant 0 : index
      %44 = vector.load %arg5[%c0_23, %c0_24] : memref<64x1xf32, #tpu.memory_space<vmem>>, vector<64x1xf32>
      tpu.vector_store %arg5[%c0_23, %c0_24], %43 {strides = array<i32>} : memref<64x1xf32, #tpu.memory_space<vmem>>, vector<64x1xf32>,
    } else {
    }
    %c0 = arith.constant 0 : index
    %c0_1 = arith.constant 0 : index
    %c0_2 = arith.constant 0 : index
    %3 = vector.load %arg2[%c0, %c0_1, %c0_2] : memref<1x64x32xbf16, #tpu.memory_space<vmem>>, vector<1x64x32xbf16>
    %4 = vector.shape_cast %3 : vector<1x64x32xbf16> to vector<64x32xbf16>
    %c0_3 = arith.constant 0 : index
    %c0_4 = arith.constant 0 : index
    %c0_5 = arith.constant 0 : index
    %5 = vector.load %arg3[%c0_3, %c0_4, %c0_5] : memref<1x32x64xbf16, #tpu.memory_space<vmem>>, vector<1x32x64xbf16>
    %6 = vector.shape_cast %5 : vector<1x32x64xbf16> to vector<32x64xbf16>
    %cst = arith.constant dense<0.000000e+00> : vector<64x64xf32>
    %7 = tpu.matmul %4, %6, %cst {dimension_numbers = #tpu.dot_dimension_numbers<[1], [0], [0], [1], [0, 0, 1, 1], [], []>} : vector<64x32xbf16>, vector<32x64xbf16>, vector<64x64xf32> -> vector<64x64xf32>
    %cst_6 = arith.constant dense<0xFF800000> : vector<64xf32>
    %8 = vector.multi_reduction <maximumf>, %7, %cst_6 [0] : vector<64x64xf32> to vector<64xf32>
    %9 = vector.shape_cast %8 : vector<64xf32> to vector<1x64xf32>
    %cst_7 = arith.constant 5.000000e-01 : f32
    %10 = vector.broadcast %cst_7 : f32 to vector<1x64xf32>
    %11 = arith.mulf %10, %9 : vector<1x64xf32>
    %cst_8 = arith.constant 5.000000e-01 : f32
    %12 = vector.broadcast %cst_8 : f32 to vector<1x64xf32>
    %13 = arith.subf %12, %11 : vector<1x64xf32>
    %cst_9 = arith.constant 1.000000e-03 : f32
    %14 = vector.broadcast %cst_9 : f32 to vector<1x64xf32>
    %15 = arith.cmpf olt, %13, %14 : vector<1x64xf32>
    %cst_10 = arith.constant 1.000000e-03 : f32
    %16 = vector.broadcast %cst_10 : f32 to vector<1x64xf32>
    %17 = arith.addf %13, %16 : vector<1x64xf32>
    %18 = arith.select %15, %17, %13 : vector<1x64xi1>, vector<1x64xf32>
    %cst_11 = arith.constant 0.999979972 : f32
    %19 = vector.broadcast %cst_11 : f32 to vector<1x64xf32>
    %20 = arith.divf %19, %18 : vector<1x64xf32>
    %cst_12 = arith.constant 1.999960e+00 : f32
    %21 = vector.broadcast %cst_12 : f32 to vector<1x64xf32>
    %22 = arith.subf %21, %20 : vector<1x64xf32>
    %23 = vector.broadcast %20 : vector<1x64xf32> to vector<64x64xf32>
    %24 = arith.mulf %7, %23 : vector<64x64xf32>
    %25 = vector.broadcast %22 : vector<1x64xf32> to vector<64x64xf32>
    %26 = arith.addf %24, %25 : vector<64x64xf32>
    %27 = math.exp %26 : vector<64x64xf32>
    %cst_13 = arith.constant dense<0.000000e+00> : vector<64xf32>
    %28 = vector.multi_reduction <add>, %27, %cst_13 [0] : vector<64x64xf32> to vector<64xf32>
    %29 = vector.shape_cast %28 : vector<64xf32> to vector<1x64xf32>
    %cst_14 = arith.constant 9.99999997E-7 : f32
    %30 = vector.broadcast %cst_14 : f32 to vector<1x64xf32>
    %31 = arith.addf %29, %30 : vector<1x64xf32>
    %32 = tpu.reciprocal %31 {approx = true} : vector<1x64xf32> -> vector<1x64xf32>
    %33 = vector.broadcast %32 : vector<1x64xf32> to vector<64x64xf32>
    %34 = arith.mulf %27, %33 : vector<64x64xf32>
    %cst_15 = arith.constant dense<0xFF800000> : vector<64xf32>
    %35 = vector.multi_reduction <maximumf>, %34, %cst_15 [1] : vector<64x64xf32> to vector<64xf32>
    %36 = vector.shape_cast %35 : vector<64xf32> to vector<64x1xf32>
    %c0_16 = arith.constant 0 : index
    %c0_17 = arith.constant 0 : index
    %37 = vector.load %arg5[%c0_16, %c0_17] : memref<64x1xf32, #tpu.memory_space<vmem>>, vector<64x1xf32>
    %38 = arith.maximumf %37, %36 : vector<64x1xf32>
    %c0_18 = arith.constant 0 : index
    %c0_19 = arith.constant 0 : index
    %39 = vector.load %arg5[%c0_18, %c0_19] : memref<64x1xf32, #tpu.memory_space<vmem>>, vector<64x1xf32>
    tpu.vector_store %arg5[%c0_18, %c0_19], %38 {strides = array<i32>} : memref<64x1xf32, #tpu.memory_space<vmem>>, vector<64x1xf32>,
    %c0_i32_20 = arith.constant 0 : i32
    %40 = arith.cmpi eq, %arg1, %c0_i32_20 : i32
    %41 = arith.extui %40 : i1 to i32
    %c0_i32_21 = arith.constant 0 : i32
    %42 = arith.cmpi ne, %41, %c0_i32_21 : i32
    scf.if %42 {
      %c0_22 = arith.constant 0 : index
      %c0_23 = arith.constant 0 : index
      %43 = vector.load %arg5[%c0_22, %c0_23] : memref<64x1xf32, #tpu.memory_space<vmem>>, vector<64x1xf32>
      %44 = vector.shape_cast %43 : vector<64x1xf32> to vector<1x64x1xf32>
      %cst_24 = arith.constant dense<0.000000e+00> : vector<1xf32>
      %45 = vector.multi_reduction <add>, %44, %cst_24 [1, 2] : vector<1x64x1xf32> to vector<1xf32>
      %46 = vector.shape_cast %45 : vector<1xf32> to vector<1x1x1xf32>
      %47 = vector.extract %46[0, 0, 0] : f32 from vector<1x1x1xf32>
      %cst_25 = arith.constant 6.400000e+01 : f32
      %48 = arith.divf %47, %cst_25 : f32
      %cst_26 = arith.constant 9.99999997E-7 : f32
      %49 = arith.maximumf %48, %cst_26 : f32
      %50 = math.log %49 : f32
      %cst_27 = arith.constant 0.000000e+00 : f32
      %51 = arith.subf %cst_27, %50 : f32
      %52 = vector.broadcast %51 : f32 to vector<1x1x1xf32>
      %c0_28 = arith.constant 0 : index
      %c0_29 = arith.constant 0 : index
      %c0_30 = arith.constant 0 : index
      %53 = vector.load %arg4[%c0_28, %c0_29, %c0_30] : memref<1x1x1xf32, #tpu.memory_space<vmem>>, vector<1x1x1xf32>
      tpu.vector_store %arg4[%c0_28, %c0_29, %c0_30], %52 {strides = array<i32>} : memref<1x1x1xf32, #tpu.memory_space<vmem>>, vector<1x1x1xf32>,
    } else {
    }
    return
  }
  func.func @transform_0(%arg0: i32, %arg1: i32) -> (i32, i32, i32) {
    %c0_i32 = arith.constant 0 : i32
    %c0_i32_0 = arith.constant 0 : i32
    %c0_i32_1 = arith.constant 0 : i32
    return %arg0, %c0_i32, %c0_i32_0 : i32, i32, i32
  }
  func.func @transform_1(%arg0: i32, %arg1: i32) -> (i32, i32, i32) {
    %c0_i32 = arith.constant 0 : i32
    %c0_i32_0 = arith.constant 0 : i32
    return %arg0, %c0_i32, %arg1 : i32, i32, i32
  }
  func.func @transform_2(%arg0: i32, %arg1: i32) -> (i32, i32, i32) {
    %c0_i32 = arith.constant 0 : i32
    %c0_i32_0 = arith.constant 0 : i32
    %c0_i32_1 = arith.constant 0 : i32
    return %arg0, %c0_i32, %c0_i32_0 : i32, i32, i32
  }
}

module attributes {stable_mosaic.version = 11 : i64} {
  func.func @_mrf_loss_kernel(%arg0: i32, %arg1: i32, %arg2: memref<1x256x16xbf16, #tpu.memory_space<vmem>>, %arg3: memref<1x16x256xbf16, #tpu.memory_space<vmem>>, %arg4: memref<1x1x1xf32, #tpu.memory_space<vmem>>, %arg5: memref<256x1xf32, #tpu.memory_space<vmem>>) attributes {dimension_semantics = [#tpu.dimension_semantics<parallel>, #tpu.dimension_semantics<arbitrary>], iteration_bounds = array<i64: 2, 1>, scalar_prefetch = 0 : i64, scratch_operands = 1 : i64, tpu.core_type = #tpu.core_type<tc>, window_params = [{transform_indices = @transform_0, window_bounds = array<i64: 1, 256, 16>}, {transform_indices = @transform_1, window_bounds = array<i64: 1, 16, 256>}, {transform_indices = @transform_2, window_bounds = array<i64: 1, 1, 1>}]} {
    %c0_i32 = arith.constant 0 : i32
    %0 = arith.cmpi eq, %arg1, %c0_i32 : i32
    %1 = arith.extui %0 : i1 to i32
    %c0_i32_0 = arith.constant 0 : i32
    %2 = arith.cmpi ne, %1, %c0_i32_0 : i32
    scf.if %2 {
      %cst_22 = arith.constant 0.000000e+00 : f32
      %43 = vector.broadcast %cst_22 : f32 to vector<256x1xf32>
      %c0_23 = arith.constant 0 : index
      %c0_24 = arith.constant 0 : index
      %44 = vector.load %arg5[%c0_23, %c0_24] : memref<256x1xf32, #tpu.memory_space<vmem>>, vector<256x1xf32>
      tpu.vector_store %arg5[%c0_23, %c0_24], %43 {strides = array<i32>} : memref<256x1xf32, #tpu.memory_space<vmem>>, vector<256x1xf32>,
    } else {
    }
    %c0 = arith.constant 0 : index
    %c0_1 = arith.constant 0 : index
    %c0_2 = arith.constant 0 : index
    %3 = vector.load %arg2[%c0, %c0_1, %c0_2] : memref<1x256x16xbf16, #tpu.memory_space<vmem>>, vector<1x256x16xbf16>
    %4 = vector.shape_cast %3 : vector<1x256x16xbf16> to vector<256x16xbf16>
    %c0_3 = arith.constant 0 : index
    %c0_4 = arith.constant 0 : index
    %c0_5 = arith.constant 0 : index
    %5 = vector.load %arg3[%c0_3, %c0_4, %c0_5] : memref<1x16x256xbf16, #tpu.memory_space<vmem>>, vector<1x16x256xbf16>
    %6 = vector.shape_cast %5 : vector<1x16x256xbf16> to vector<16x256xbf16>
    %cst = arith.constant dense<0.000000e+00> : vector<256x256xf32>
    %7 = tpu.matmul %4, %6, %cst {dimension_numbers = #tpu.dot_dimension_numbers<[1], [0], [0], [1], [0, 0, 1, 1], [], []>} : vector<256x16xbf16>, vector<16x256xbf16>, vector<256x256xf32> -> vector<256x256xf32>
    %cst_6 = arith.constant dense<0xFF800000> : vector<256xf32>
    %8 = vector.multi_reduction <maximumf>, %7, %cst_6 [0] : vector<256x256xf32> to vector<256xf32>
    %9 = vector.shape_cast %8 : vector<256xf32> to vector<1x256xf32>
    %cst_7 = arith.constant 5.000000e-01 : f32
    %10 = vector.broadcast %cst_7 : f32 to vector<1x256xf32>
    %11 = arith.mulf %10, %9 : vector<1x256xf32>
    %cst_8 = arith.constant 5.000000e-01 : f32
    %12 = vector.broadcast %cst_8 : f32 to vector<1x256xf32>
    %13 = arith.subf %12, %11 : vector<1x256xf32>
    %cst_9 = arith.constant 1.000000e-03 : f32
    %14 = vector.broadcast %cst_9 : f32 to vector<1x256xf32>
    %15 = arith.cmpf olt, %13, %14 : vector<1x256xf32>
    %cst_10 = arith.constant 1.000000e-03 : f32
    %16 = vector.broadcast %cst_10 : f32 to vector<1x256xf32>
    %17 = arith.addf %13, %16 : vector<1x256xf32>
    %18 = arith.select %15, %17, %13 : vector<1x256xi1>, vector<1x256xf32>
    %cst_11 = arith.constant 0.999979972 : f32
    %19 = vector.broadcast %cst_11 : f32 to vector<1x256xf32>
    %20 = arith.divf %19, %18 : vector<1x256xf32>
    %cst_12 = arith.constant 1.999960e+00 : f32
    %21 = vector.broadcast %cst_12 : f32 to vector<1x256xf32>
    %22 = arith.subf %21, %20 : vector<1x256xf32>
    %23 = vector.broadcast %20 : vector<1x256xf32> to vector<256x256xf32>
    %24 = arith.mulf %7, %23 : vector<256x256xf32>
    %25 = vector.broadcast %22 : vector<1x256xf32> to vector<256x256xf32>
    %26 = arith.addf %24, %25 : vector<256x256xf32>
    %27 = math.exp %26 : vector<256x256xf32>
    %cst_13 = arith.constant dense<0.000000e+00> : vector<256xf32>
    %28 = vector.multi_reduction <add>, %27, %cst_13 [0] : vector<256x256xf32> to vector<256xf32>
    %29 = vector.shape_cast %28 : vector<256xf32> to vector<1x256xf32>
    %cst_14 = arith.constant 9.99999997E-7 : f32
    %30 = vector.broadcast %cst_14 : f32 to vector<1x256xf32>
    %31 = arith.addf %29, %30 : vector<1x256xf32>
    %32 = tpu.reciprocal %31 {approx = true} : vector<1x256xf32> -> vector<1x256xf32>
    %33 = vector.broadcast %32 : vector<1x256xf32> to vector<256x256xf32>
    %34 = arith.mulf %27, %33 : vector<256x256xf32>
    %cst_15 = arith.constant dense<0xFF800000> : vector<256xf32>
    %35 = vector.multi_reduction <maximumf>, %34, %cst_15 [1] : vector<256x256xf32> to vector<256xf32>
    %36 = vector.shape_cast %35 : vector<256xf32> to vector<256x1xf32>
    %c0_16 = arith.constant 0 : index
    %c0_17 = arith.constant 0 : index
    %37 = vector.load %arg5[%c0_16, %c0_17] : memref<256x1xf32, #tpu.memory_space<vmem>>, vector<256x1xf32>
    %38 = arith.maximumf %37, %36 : vector<256x1xf32>
    %c0_18 = arith.constant 0 : index
    %c0_19 = arith.constant 0 : index
    %39 = vector.load %arg5[%c0_18, %c0_19] : memref<256x1xf32, #tpu.memory_space<vmem>>, vector<256x1xf32>
    tpu.vector_store %arg5[%c0_18, %c0_19], %38 {strides = array<i32>} : memref<256x1xf32, #tpu.memory_space<vmem>>, vector<256x1xf32>,
    %c0_i32_20 = arith.constant 0 : i32
    %40 = arith.cmpi eq, %arg1, %c0_i32_20 : i32
    %41 = arith.extui %40 : i1 to i32
    %c0_i32_21 = arith.constant 0 : i32
    %42 = arith.cmpi ne, %41, %c0_i32_21 : i32
    scf.if %42 {
      %c0_22 = arith.constant 0 : index
      %c0_23 = arith.constant 0 : index
      %43 = vector.load %arg5[%c0_22, %c0_23] : memref<256x1xf32, #tpu.memory_space<vmem>>, vector<256x1xf32>
      %44 = vector.shape_cast %43 : vector<256x1xf32> to vector<1x256x1xf32>
      %cst_24 = arith.constant dense<0.000000e+00> : vector<1xf32>
      %45 = vector.multi_reduction <add>, %44, %cst_24 [1, 2] : vector<1x256x1xf32> to vector<1xf32>
      %46 = vector.shape_cast %45 : vector<1xf32> to vector<1x1x1xf32>
      %47 = vector.extract %46[0, 0, 0] : f32 from vector<1x1x1xf32>
      %cst_25 = arith.constant 2.560000e+02 : f32
      %48 = arith.divf %47, %cst_25 : f32
      %cst_26 = arith.constant 9.99999997E-7 : f32
      %49 = arith.maximumf %48, %cst_26 : f32
      %50 = math.log %49 : f32
      %cst_27 = arith.constant 0.000000e+00 : f32
      %51 = arith.subf %cst_27, %50 : f32
      %52 = vector.broadcast %51 : f32 to vector<1x1x1xf32>
      %c0_28 = arith.constant 0 : index
      %c0_29 = arith.constant 0 : index
      %c0_30 = arith.constant 0 : index
      %53 = vector.load %arg4[%c0_28, %c0_29, %c0_30] : memref<1x1x1xf32, #tpu.memory_space<vmem>>, vector<1x1x1xf32>
      tpu.vector_store %arg4[%c0_28, %c0_29, %c0_30], %52 {strides = array<i32>} : memref<1x1x1xf32, #tpu.memory_space<vmem>>, vector<1x1x1xf32>,
    } else {
    }
    return
  }
  func.func @transform_0(%arg0: i32, %arg1: i32) -> (i32, i32, i32) {
    %c0_i32 = arith.constant 0 : i32
    %c0_i32_0 = arith.constant 0 : i32
    %c0_i32_1 = arith.constant 0 : i32
    return %arg0, %c0_i32, %c0_i32_0 : i32, i32, i32
  }
  func.func @transform_1(%arg0: i32, %arg1: i32) -> (i32, i32, i32) {
    %c0_i32 = arith.constant 0 : i32
    %c0_i32_0 = arith.constant 0 : i32
    return %arg0, %c0_i32, %arg1 : i32, i32, i32
  }
  func.func @transform_2(%arg0: i32, %arg1: i32) -> (i32, i32, i32) {
    %c0_i32 = arith.constant 0 : i32
    %c0_i32_0 = arith.constant 0 : i32
    %c0_i32_1 = arith.constant 0 : i32
    return %arg0, %c0_i32, %c0_i32_0 : i32, i32, i32
  }
}

</mosaic_0001>

<llo_original>
// kernel: idmrf_loss.4
$region0: #{idmrf_loss.4}
  #allocation0 [shape = 'u32[]', space=smem, size = 0x4, offset = 0x4, fixed_abs, tag = 'smem constant byte address 0x4 - core index']
  #allocation1 [shape = 'u32[144,128]{1,0:T(1,128)}', space=vmem, size = 0x12000, scoped, tag = 'internal scratch']
  #allocation2 [shape = 'f32[64,1]{1,0:T(8,128)}', space=vmem, size = 0x8000, scoped, tag = 'scratch operand']
  %s0 = inlined_call_operand.vmem [shape: bf16[2,64,32], index: 0, kind: input, shape index: {}]
  %s1 = inlined_call_operand.vmem [shape: bf16[2,32,64], index: 1, kind: input, shape index: {}]
  %s2 = inlined_call_operand.vmem [shape: f32[2,1,1], index: 2, kind: output, shape index: {}]
  %s3 = sld [smem:[#allocation0]]
  $region49: #{idmrf_loss.4} parent=0
    _
  %s5 = ssub.s32 1, %s3
  %s6 = scalar_select 0, %s5, %s3
  loop: start=0, step=1, limit=4
  $region2: #{idmrf_loss.4} parent=0 // loop_pre_header
    _
  $region3: #{idmrf_loss.4} parent=0 // loop_header
    %s8 = sphi 0, %s12
    %p9 = scmp.ge.s32.totalorder %s8, 4
    %s15 = sphi 0, %s27
    %s16 = sphi 0, %s23
    %s17 = sphi 0, %s15
    %s18 = sphi 0, %s16
    %s19 = sphi 0, %s17
    %s20 = sphi 0, %s18
    %s30 = sphi 0, %s32
    %s33 = sphi 0, %s30
    %s34 = sphi 0, %s33
    %s50 = sphi 0, %s34
    %s58 = sphi 0, %s60
    %s61 = sphi 0, %s58
    %s62 = sphi 0, %s61
    %s78 = sphi 0, %s62
    %s84 = sphi 0, %s86
    %s87 = sphi 0, %s84
    %s88 = sphi 0, %s87
    %s104 = sphi 0, %s88
  $region4: #{idmrf_loss.4} parent=0 // loop_header_branch
    %11 = sbr.rel (%p9) target = $region8
  $region5: #{idmrf_loss.4} parent=0 // loop_body
    %s13 = ssub.s32 %s8, 1
    %s14 = ssub.s32 %s8, 2
    %s21 = sadd.s32 1, %s16
    %p22 = scmp.ge.s32.totalorder %s21, 1
    %s23 = scalar_select %p22, 0, %s21
    %s24 = sadd.s32 1, %s15
    %s25 = scalar_select %p22, %s24, %s15
    %p26 = scmp.ge.s32.totalorder %s25, 2
    %s27 = scalar_select %p26, 0, %s25
    %s28 = ssub.s32 %s15, %s27
    %p29 = scmp.eq.s32.totalorder %s28, 0
    %s31 = sadd.s32 %s30, 1
    %s32 = scalar_select %p29, %s30, %s31
    %p35 = pneg %p29
    %p36 = scmp.eq.s32.totalorder %s8, 1
    %p37 = por %p35, %p36
    %p38 = scmp.ne.s32.totalorder %s30, %s33
    %p39 = scmp.eq.s32.totalorder %s8, 0
    %p40 = por %p38, %p39
    %p41 = scmp.ne.s32.totalorder %s30, %s33
    %p42 = scmp.eq.s32.totalorder %s13, 1
    %p43 = por %p41, %p42
    %p44 = scmp.ne.s32.totalorder %s33, %s34
    %p45 = scmp.eq.s32.totalorder %s13, 0
    %p46 = por %p44, %p45
    %p47 = scmp.ne.s32.totalorder %s33, %s34
    %p48 = scmp.eq.s32.totalorder %s14, 1
    %p49 = por %p47, %p48
    %p51 = scmp.ne.s32.totalorder %s34, %s50
    %p52 = scmp.eq.s32.totalorder %s14, 0
    %p53 = por %p51, %p52
    %s54 = ssub.s32 %s15, %s27
    %s55 = ssub.s32 %s16, %s23
    %s56 = sor.u32 %s54, %s55
    %p57 = scmp.eq.s32.totalorder %s56, 0
    %s59 = sadd.s32 %s58, 1
    %s60 = scalar_select %p57, %s58, %s59
    %p63 = pneg %p57
    %p64 = scmp.eq.s32.totalorder %s8, 1
    %p65 = por %p63, %p64
    %p66 = scmp.ne.s32.totalorder %s58, %s61
    %p67 = scmp.eq.s32.totalorder %s8, 0
    %p68 = por %p66, %p67
    %p69 = scmp.ne.s32.totalorder %s58, %s61
    %p70 = scmp.eq.s32.totalorder %s13, 1
    %p71 = por %p69, %p70
    %p72 = scmp.ne.s32.totalorder %s61, %s62
    %p73 = scmp.eq.s32.totalorder %s13, 0
    %p74 = por %p72, %p73
    %p75 = scmp.ne.s32.totalorder %s61, %s62
    %p76 = scmp.eq.s32.totalorder %s14, 1
    %p77 = por %p75, %p76
    %p79 = scmp.ne.s32.totalorder %s62, %s78
    %p80 = scmp.eq.s32.totalorder %s14, 0
    %p81 = por %p79, %p80
    %s82 = ssub.s32 %s15, %s27
    %p83 = scmp.eq.s32.totalorder %s82, 0
    %s85 = sadd.s32 %s84, 1
    %s86 = scalar_select %p83, %s84, %s85
    %p89 = pneg %p83
    %p90 = scmp.eq.s32.totalorder %s8, 1
    %p91 = por %p89, %p90
    %p92 = scmp.ne.s32.totalorder %s84, %s87
    %p93 = scmp.eq.s32.totalorder %s8, 0
    %p94 = por %p92, %p93
    %p95 = scmp.ne.s32.totalorder %s84, %s87
    %p96 = scmp.eq.s32.totalorder %s13, 1
    %p97 = por %p95, %p96
    %p98 = scmp.ne.s32.totalorder %s87, %s88
    %p99 = scmp.eq.s32.totalorder %s13, 0
    %p100 = por %p98, %p99
    %p101 = scmp.ne.s32.totalorder %s87, %s88
    %p102 = scmp.eq.s32.totalorder %s14, 1
    %p103 = por %p101, %p102
    %p105 = scmp.ne.s32.totalorder %s88, %s104
    %p106 = scmp.eq.s32.totalorder %s14, 0
    %p107 = por %p105, %p106
    %p108 = scmp.le.s32.totalorder 1, %s8
    %p109 = scmp.lt.s32.totalorder %s8, 3
    %p110 = pnand %p108, %p109
    %p111 = pneg %p110
    // Predicated region
    $region9: #{idmrf_loss.4} parent=5 // pred_check
      _
    $region10: #{idmrf_loss.4} parent=5 // pred_check_branch
      %113 = sbr.rel (%p110) target = $region12
    $region11: #{idmrf_loss.4} parent=5 // pred_region
      %s114 = ssub.s32 %s8, 1
    $region12: #{idmrf_loss.4} parent=5 // pred_fallthru
      _
    %p115 = scmp.lt.s32.totalorder %s8, 2
    // Predicated region
    $region13: #{idmrf_loss.4} parent=5 // pred_check
      %p116 = pneg %p115
    $region14: #{idmrf_loss.4} parent=5 // pred_check_branch
      %118 = sbr.rel (%p116) target = $region16
    $region15: #{idmrf_loss.4} parent=5 // pred_region
      // Predicated region
      $region17: #{idmrf_loss.4} parent=15 // pred_check
        %p119 = pneg %p40
      $region18: #{idmrf_loss.4} parent=15 // pred_check_branch
        %121 = sbr.rel (%p119) target = $region20
      $region19: #{idmrf_loss.4} parent=15 // pred_region
        %p122 = scmp.lt.s32.totalorder %s15, 1
        %s123 = scalar_select %p122, %s15, 1
        %s124 = smul.addr %s123, 8
        %s125 = smul.addr %s124, 4
        %s126 = scalar_lea.vmem %s0, %s125
      $region20: #{idmrf_loss.4} parent=15 // pred_fallthru
        _
      // Predicated region
      $region21: #{idmrf_loss.4} parent=15 // pred_check
        %p127 = pneg %p68
      $region22: #{idmrf_loss.4} parent=15 // pred_check_branch
        %129 = sbr.rel (%p127) target = $region24
      $region23: #{idmrf_loss.4} parent=15 // pred_region
        %p130 = scmp.lt.s32.totalorder %s15, 1
        %s131 = scalar_select %p130, %s15, 1
        %p132 = scmp.lt.s32.totalorder %s16, 0
        %s133 = scalar_select %p132, %s16, 0
        %s134 = smul.addr %s131, 4
        %s135 = sadd.s32 %s133, %s134
        %s136 = smul.addr %s135, 4
        %s137 = scalar_lea.vmem %s1, %s136
      $region24: #{idmrf_loss.4} parent=15 // pred_fallthru
        _
    $region16: #{idmrf_loss.4} parent=5 // pred_fallthru
      _
    %p138 = scmp.le.s32.totalorder 1, %s8
    %p139 = scmp.lt.s32.totalorder %s8, 3
    %p140 = pnand %p138, %p139
    %p141 = pneg %p140
    // Predicated region
    $region25: #{idmrf_loss.4} parent=5 // pred_check
      _
    $region26: #{idmrf_loss.4} parent=5 // pred_check_branch
      %143 = sbr.rel (%p140) target = $region28
    $region27: #{idmrf_loss.4} parent=5 // pred_region
      %s144 = ssub.s32 %s8, 1
      %p145 = scmp.lt.s32.totalorder %s17, 1
      %s146 = scalar_select %p145, %s17, 1
      %s147 = smul.addr %s146, 8
      %s148 = smul.addr %s147, 4
      %s149 = scalar_lea.vmem %s0, %s148
      %p150 = pneg %p46
      %p151 = pneg %p43
      %p152 = scmp.lt.s32.totalorder %s17, 1
      %s153 = scalar_select %p152, %s17, 1
      %p154 = scmp.lt.s32.totalorder %s18, 0
      %s155 = scalar_select %p154, %s18, 0
      %s156 = smul.addr %s153, 4
      %s157 = sadd.s32 %s155, %s156
      %s158 = smul.addr %s157, 4
      %s159 = scalar_lea.vmem %s1, %s158
      %p160 = pneg %p74
      %p161 = pneg %p71
      %p162 = pneg %p100
      %p163 = pneg %p97
      %p164 = scmp.lt.s32.totalorder %s17, 1
      %s165 = scalar_select %p164, %s17, 1
      %s166 = scalar_lea.vmem %s2, %s165
      %p167 = scmp.lt.s32.totalorder %s17, 1
      %s168 = scalar_select %p167, %s17, 1
      %s169 = smul.addr %s168, 8
      %s170 = smul.addr %s169, 4
      %s171 = scalar_lea.vmem %s0, %s170
      %p172 = scmp.lt.s32.totalorder %s17, 1
      %s173 = scalar_select %p172, %s17, 1
      %p174 = scmp.lt.s32.totalorder %s18, 0
      %s175 = scalar_select %p174, %s18, 0
      %s176 = smul.addr %s173, 4
      %s177 = sadd.s32 %s175, %s176
      %s178 = smul.addr %s177, 4
      %s179 = scalar_lea.vmem %s1, %s178
      %p180 = scmp.lt.s32.totalorder %s17, 1
      %s181 = scalar_select %p180, %s17, 1
      %s182 = scalar_lea.vmem %s2, %s181
      %p184 = scmp.eq.s32.totalorder %s18, 0
      // Predicated region
      $region29: #{idmrf_loss.4} parent=27 // pred_check
        %p185 = pneg %p184
      $region30: #{idmrf_loss.4} parent=27 // pred_check_branch
        %187 = sbr.rel (%p185) target = $region32
      $region31: #{idmrf_loss.4} parent=27 // pred_region
        %vm188 = vcmask 7168
        %189 = vst.msk [vmem:[#allocation2] sm:$0xff] %vm188, 0.0
        %190 = vst.msk [vmem:[#allocation2 + $0x8] sm:$0xff] %vm188, 0.0
        %191 = vst.msk [vmem:[#allocation2 + $0x10] sm:$0xff] %vm188, 0.0
        %192 = vst.msk [vmem:[#allocation2 + $0x18] sm:$0xff] %vm188, 0.0
        %193 = vst.msk [vmem:[#allocation2 + $0x20] sm:$0xff] %vm188, 0.0
        %194 = vst.msk [vmem:[#allocation2 + $0x28] sm:$0xff] %vm188, 0.0
        %195 = vst.msk [vmem:[#allocation2 + $0x30] sm:$0xff] %vm188, 0.0
        %196 = vst.msk [vmem:[#allocation2 + $0x38] sm:$0xff] %vm188, 0.0
      $region32: #{idmrf_loss.4} parent=27 // pred_fallthru
        _
      %v197 = vld [vmem:[%s171] sm:$0xf]
      %v198 = vld [vmem:[%s171 + $0x4] sm:$0xf]
      %v199 = vld [vmem:[%s171 + $0x8] sm:$0xf]
      %v200 = vld [vmem:[%s171 + $0xc] sm:$0xf]
      %v201 = vld [vmem:[%s171 + $0x10] sm:$0xf]
      %v202 = vld [vmem:[%s171 + $0x14] sm:$0xf]
      %v203 = vld [vmem:[%s171 + $0x18] sm:$0xf]
      %v204 = vld [vmem:[%s171 + $0x1c] sm:$0xf]
      %v205 = vld [vmem:[%s179] sm:$0xf]
      %v206 = vld [vmem:[%s179 + $0x4] sm:$0xf]
      %v207 = vld [vmem:[%s179 + $0x8] sm:$0xf]
      %v208 = vld [vmem:[%s179 + $0xc] sm:$0xf]
      %v217 = vunpack.c.l.b16 %v197
      %v218 = vunpack.c.l.b16 %v198
      %v219 = vunpack.c.l.b16 %v199
      %v220 = vunpack.c.l.b16 %v200
      %v221 = vunpack.c.l.b16 %v201
      %v222 = vunpack.c.l.b16 %v202
      %v223 = vunpack.c.l.b16 %v203
      %v224 = vunpack.c.l.b16 %v204
      %v225 = vpack.c.b16 %v218, %v217
      %v226 = vpack.c.b16 %v220, %v219
      %v227 = vpack.c.b16 %v222, %v221
      %v228 = vpack.c.b16 %v224, %v223
      %v233 = vunpack.c.l.b16 %v205
      %v234 = vunpack.c.l.b16 %v206
      %v235 = vunpack.c.l.b16 %v207
      %v236 = vunpack.c.l.b16 %v208
      %v237 = vpack.c.b16 %v234, %v233
      %v238 = vpack.c.b16 %v236, %v235
      %vm241 = vcmask 261120
      %v243 = vsel %vm241, %v225, 0
      %v246 = vsel %vm241, %v226, 0
      %v249 = vsel %vm241, %v227, 0
      %v252 = vsel %vm241, %v228, 0
      %254 = vmatprep.subr.bf16.mxu0 0
      %255 = vmatpush1.bf16.msra.mxu0 0
      %256 = vmatprep.subr.bf16.mxu0 0
      %257 = vmatpush1.bf16.msra.mxu0 0
      %258 = vmatprep.subr.bf16.mxu0 0
      %259 = vmatpush1.bf16.msra.mxu0 0
      %260 = vmatprep.subr.bf16.mxu0 0
      %261 = vmatpush1.bf16.msra.mxu0 0
      %262 = vmatprep.subr.bf16.mxu0 0
      %263 = vmatpush1.bf16.msra.mxu0 0
      %264 = vmatprep.subr.bf16.mxu0 0
      %265 = vmatpush1.bf16.msra.mxu0 0
      %266 = vmatprep.subr.bf16.mxu0 0
      %267 = vmatpush1.bf16.msra.mxu0 %v238
      %268 = vmatprep.subr.bf16.mxu0 0
      %269 = vmatpush1.bf16.msra.mxu0 %v237
      %270 = vmatprep.subr.bf16.mxu0 0
      %271 = vmatpush2.bf16.msra.mxu0 0
      %272 = vmatprep.subr.bf16.mxu0 0
      %273 = vmatpush2.bf16.msra.mxu0 0
      %274 = vmatprep.subr.bf16.mxu0 0
      %275 = vmatpush2.bf16.msra.mxu0 0
      %276 = vmatprep.subr.bf16.mxu0 0
      %277 = vmatpush2.bf16.msra.mxu0 0
      %278 = vmatprep.subr.bf16.mxu0 0
      %279 = vmatpush2.bf16.msra.mxu0 0
      %280 = vmatprep.subr.bf16.mxu0 0
      %281 = vmatpush2.bf16.msra.mxu0 0
      %282 = vmatprep.subr.bf16.mxu0 0
      %283 = vmatpush2.bf16.msra.mxu0 0
      %284 = vmatprep.subr.bf16.mxu0 0
      %285 = vmatpush2.bf16.msra.mxu0 0
      %286 = vmatprep.mubr.bf16.mxu0 0
      %287 = vmatmul.mubr.bf16.gmra.mxu0 %v243
      %v288 = vpop.f32.mrf.mxu0
      %v289 = vadd.f32 0.0, %v288
      %v290 = vpop.f32.mrf.mxu0
      %v291 = vpop.f32.mrf.mxu0
      %v292 = vadd.f32 0.0, %v291
      %v293 = vpop.f32.mrf.mxu0
      %294 = vmatprep.mubr.bf16.mxu0 0
      %295 = vmatmul.mubr.bf16.gmra.mxu0 %v246
      %v296 = vpop.f32.mrf.mxu0
      %v297 = vadd.f32 0.0, %v296
      %v298 = vpop.f32.mrf.mxu0
      %v299 = vpop.f32.mrf.mxu0
      %v300 = vadd.f32 0.0, %v299
      %v301 = vpop.f32.mrf.mxu0
      %302 = vmatprep.mubr.bf16.mxu0 0
      %303 = vmatmul.mubr.bf16.gmra.mxu0 %v249
      %v304 = vpop.f32.mrf.mxu0
      %v305 = vadd.f32 0.0, %v304
      %v306 = vpop.f32.mrf.mxu0
      %v307 = vpop.f32.mrf.mxu0
      %v308 = vadd.f32 0.0, %v307
      %v309 = vpop.f32.mrf.mxu0
      %310 = vmatprep.mubr.bf16.mxu0 0
      %311 = vmatmul.mubr.bf16.gmra.mxu0 %v252
      %v312 = vpop.f32.mrf.mxu0
      %v313 = vadd.f32 0.0, %v312
      %v314 = vpop.f32.mrf.mxu0
      %v315 = vpop.f32.mrf.mxu0
      %v316 = vadd.f32 0.0, %v315
      %v317 = vpop.f32.mrf.mxu0
      %318 = vdwg.mxu0
      %vm319 = vcmask 523264
      %v320 = vsel %vm319, %v289, -inf
      %v321 = vsel %vm319, %v292, -inf
      %v322 = vsel %vm319, %v297, -inf
      %v323 = vsel %vm319, %v300, -inf
      %v324 = vsel %vm319, %v305, -inf
      %v325 = vmax.f32 %v320, %v324
      %v326 = vsel %vm319, %v308, -inf
      %v327 = vmax.f32 %v321, %v326
      %v328 = vsel %vm319, %v313, -inf
      %v329 = vmax.f32 %v322, %v328
      %v330 = vsel %vm319, %v316, -inf
      %v331 = vmax.f32 %v323, %v330
      %v332 = vmax.f32 %v325, %v327
      %v333 = vmax.f32 %v329, %v331
      %v334 = vmax.f32 %v332, %v333
      %v335 = vrot.slane %v334, 4
      %v336 = vmax.f32 %v334, %v335
      %v337 = vrot.slane %v336, 2
      %v338 = vmax.f32 %v336, %v337
      %v339 = vrot.slane %v338, 1
      %v340 = vmax.f32 %v338, %v339
      %v341 = vmul.f32 %v340, 0.5
      %v342 = vsub.f32 0.5, %v341
      %vm343 = vcmp.lt.f32.partialorder %v342, 0.001
      %v344 = vadd.f32 %v342, 0.001
      %v345 = vsel %vm343, %v344, %v342
      %v346 = vrcp.pop %v345
      %v347 = vmul.f32 0.99998, %v346
      %v348 = vsub.f32 1.99996, %v347
      %v349 = vmul.f32 %v289, %v347
      %v350 = vmul.f32 %v292, %v347
      %v351 = vmul.f32 %v297, %v347
      %v352 = vmul.f32 %v300, %v347
      %v353 = vmul.f32 %v305, %v347
      %v354 = vmul.f32 %v308, %v347
      %v355 = vmul.f32 %v313, %v347
      %v356 = vmul.f32 %v316, %v347
      %v357 = vadd.f32 %v349, %v348
      %v358 = vadd.f32 %v350, %v348
      %v359 = vadd.f32 %v351, %v348
      %v360 = vadd.f32 %v352, %v348
      %v361 = vadd.f32 %v353, %v348
      %v362 = vadd.f32 %v354, %v348
      %v363 = vadd.f32 %v355, %v348
      %v364 = vadd.f32 %v356, %v348
      %v365 = vmul.f32 %v357, 1.442695
      %v366 = vpow.pop %v365
      %v367 = vmul.f32 %v358, 1.442695
      %v368 = vpow.pop %v367
      %v369 = vmul.f32 %v359, 1.442695
      %v370 = vpow.pop %v369
      %v371 = vmul.f32 %v360, 1.442695
      %v372 = vpow.pop %v371
      %v373 = vmul.f32 %v361, 1.442695
      %v374 = vpow.pop %v373
      %v375 = vmul.f32 %v362, 1.442695
      %v376 = vpow.pop %v375
      %v377 = vmul.f32 %v363, 1.442695
      %v378 = vpow.pop %v377
      %v379 = vmul.f32 %v364, 1.442695
      %v380 = vpow.pop %v379
      %v381 = vsel %vm319, %v366, 0.0
      %v382 = vsel %vm319, %v368, 0.0
      %v383 = vadd.f32 %v381, %v382
      %v384 = vsel %vm319, %v370, 0.0
      %v385 = vadd.f32 %v383, %v384
      %v386 = vsel %vm319, %v372, 0.0
      %v387 = vadd.f32 %v385, %v386
      %v388 = vsel %vm319, %v374, 0.0
      %v389 = vadd.f32 %v387, %v388
      %v390 = vsel %vm319, %v376, 0.0
      %v391 = vadd.f32 %v389, %v390
      %v392 = vsel %vm319, %v378, 0.0
      %v393 = vadd.f32 %v391, %v392
      %v394 = vsel %vm319, %v380, 0.0
      %v395 = vadd.f32 %v393, %v394
      %v396 = vrot.slane %v395, 4
      %v397 = vadd.f32 %v395, %v396
      %v398 = vrot.slane %v397, 2
      %v399 = vadd.f32 %v397, %v398
      %v400 = vrot.slane %v399, 1
      %v401 = vadd.f32 %v399, %v400
      %v402 = vadd.f32 %v401, 1e-06
      %v403 = vrcp.pop %v402
      %v404 = vmul.f32 %v366, %v403
      %v405 = vmul.f32 %v368, %v403
      %v406 = vmul.f32 %v370, %v403
      %v407 = vmul.f32 %v372, %v403
      %v408 = vmul.f32 %v374, %v403
      %v409 = vmul.f32 %v376, %v403
      %v410 = vmul.f32 %v378, %v403
      %v411 = vmul.f32 %v380, %v403
      %v412 = vsel %vm319, %v404, -inf
      %413 = vmax.xlane.f32.xlu0 %v412
      %v414 = vpop.xlane.xlu0 %413
      %v415 = vsel %vm319, %v405, -inf
      %416 = vmax.xlane.f32.xlu0 %v415
      %v417 = vpop.xlane.xlu0 %416
      %v418 = vsel %vm319, %v406, -inf
      %419 = vmax.xlane.f32.xlu0 %v418
      %v420 = vpop.xlane.xlu0 %419
      %v421 = vsel %vm319, %v407, -inf
      %422 = vmax.xlane.f32.xlu0 %v421
      %v423 = vpop.xlane.xlu0 %422
      %v424 = vsel %vm319, %v408, -inf
      %425 = vmax.xlane.f32.xlu0 %v424
      %v426 = vpop.xlane.xlu0 %425
      %v427 = vsel %vm319, %v409, -inf
      %428 = vmax.xlane.f32.xlu0 %v427
      %v429 = vpop.xlane.xlu0 %428
      %v430 = vsel %vm319, %v410, -inf
      %431 = vmax.xlane.f32.xlu0 %v430
      %v432 = vpop.xlane.xlu0 %431
      %v433 = vsel %vm319, %v411, -inf
      %434 = vmax.xlane.f32.xlu0 %v433
      %v435 = vpop.xlane.xlu0 %434
      %v436 = vld [vmem:[#allocation2] sm:$0xff]
      %v437 = vld [vmem:[#allocation2 + $0x8] sm:$0xff]
      %v438 = vld [vmem:[#allocation2 + $0x10] sm:$0xff]
      %v439 = vld [vmem:[#allocation2 + $0x18] sm:$0xff]
      %v440 = vld [vmem:[#allocation2 + $0x20] sm:$0xff]
      %v441 = vld [vmem:[#allocation2 + $0x28] sm:$0xff]
      %v442 = vld [vmem:[#allocation2 + $0x30] sm:$0xff]
      %v443 = vld [vmem:[#allocation2 + $0x38] sm:$0xff]
      %v444 = vmax.f32 %v436, %v414
      %v445 = vmax.f32 %v437, %v417
      %v446 = vmax.f32 %v438, %v420
      %v447 = vmax.f32 %v439, %v423
      %v448 = vmax.f32 %v440, %v426
      %v449 = vmax.f32 %v441, %v429
      %v450 = vmax.f32 %v442, %v432
      %v451 = vmax.f32 %v443, %v435
      %vm452 = vcmask 7168
      %453 = vst.msk [vmem:[#allocation2] sm:$0xff] %vm452, %v444
      %454 = vst.msk [vmem:[#allocation2 + $0x8] sm:$0xff] %vm452, %v445
      %455 = vst.msk [vmem:[#allocation2 + $0x10] sm:$0xff] %vm452, %v446
      %456 = vst.msk [vmem:[#allocation2 + $0x18] sm:$0xff] %vm452, %v447
      %457 = vst.msk [vmem:[#allocation2 + $0x20] sm:$0xff] %vm452, %v448
      %458 = vst.msk [vmem:[#allocation2 + $0x28] sm:$0xff] %vm452, %v449
      %459 = vst.msk [vmem:[#allocation2 + $0x30] sm:$0xff] %vm452, %v450
      %460 = vst.msk [vmem:[#allocation2 + $0x38] sm:$0xff] %vm452, %v451
      // Predicated region
      $region33: #{idmrf_loss.4} parent=27 // pred_check
        %p461 = pneg %p184
      $region34: #{idmrf_loss.4} parent=27 // pred_check_branch
        %463 = sbr.rel (%p461) target = $region36
      $region35: #{idmrf_loss.4} parent=27 // pred_region
        %v464 = vld [vmem:[#allocation2] sm:$0xff]
        %v465 = vld [vmem:[#allocation2 + $0x8] sm:$0xff]
        %v466 = vld [vmem:[#allocation2 + $0x10] sm:$0xff]
        %v467 = vld [vmem:[#allocation2 + $0x18] sm:$0xff]
        %v468 = vld [vmem:[#allocation2 + $0x20] sm:$0xff]
        %v469 = vld [vmem:[#allocation2 + $0x28] sm:$0xff]
        %v470 = vld [vmem:[#allocation2 + $0x30] sm:$0xff]
        %v471 = vld [vmem:[#allocation2 + $0x38] sm:$0xff]
        %v472 = vsel %vm452, %v464, 0.0
        %v473 = vsel %vm452, %v465, 0.0
        %v474 = vadd.f32 %v472, %v473
        %v475 = vsel %vm452, %v466, 0.0
        %v476 = vadd.f32 %v474, %v475
        %v477 = vsel %vm452, %v467, 0.0
        %v478 = vadd.f32 %v476, %v477
        %v479 = vsel %vm452, %v468, 0.0
        %v480 = vadd.f32 %v478, %v479
        %v481 = vsel %vm452, %v469, 0.0
        %v482 = vadd.f32 %v480, %v481
        %v483 = vsel %vm452, %v470, 0.0
        %v484 = vadd.f32 %v482, %v483
        %v485 = vsel %vm452, %v471, 0.0
        %v486 = vadd.f32 %v484, %v485
        %487 = vadd.xlane.f32.xlu0 %v486
        %v488 = vpop.xlane.xlu0 %487
        %v489 = vrot.slane %v488, 4
        %v490 = vadd.f32 %v488, %v489
        %v491 = vrot.slane %v490, 2
        %v492 = vadd.f32 %v490, %v491
        %v493 = vrot.slane %v492, 1
        %v494 = vadd.f32 %v492, %v493
        %s495 = vtos %v494
        %v496 = vrcp.pop 64.0
        %s497 = vtos %v496
        %s498 = smul.f32 %s495, %s497
        %s499 = smax.f32 %s498, 1e-06
        %v500 = vstv %s499
        %v501 = vlog2.pop %v500
        %v502 = vmul.f32 %v501, 0.6931472
        %s503 = vtos %v502
        %s504 = ssub.f32 0.0, %s503
        %v505 = vstv %s504
        %vm506 = vcmask 0
        %507 = vst.msk [vmem:[%s182] sm:$0x1] %vm506, %v505
      $region36: #{idmrf_loss.4} parent=27 // pred_fallthru
        _
      %p508 = scmp.lt.s32.totalorder %s17, 1
      %s509 = scalar_select %p508, %s17, 1
      %s510 = scalar_lea.vmem %s2, %s509
      // Predicated region
      $region37: #{idmrf_loss.4} parent=27 // pred_check
        %p511 = pneg %p97
      $region38: #{idmrf_loss.4} parent=27 // pred_check_branch
        %513 = sbr.rel (%p511) target = $region40
      $region39: #{idmrf_loss.4} parent=27 // pred_region
        _
      $region40: #{idmrf_loss.4} parent=27 // pred_fallthru
        _
    $region28: #{idmrf_loss.4} parent=5 // pred_fallthru
      _
    %p514 = scmp.le.s32.totalorder 2, %s8
    // Predicated region
    $region41: #{idmrf_loss.4} parent=5 // pred_check
      %p515 = pneg %p514
    $region42: #{idmrf_loss.4} parent=5 // pred_check_branch
      %517 = sbr.rel (%p515) target = $region44
    $region43: #{idmrf_loss.4} parent=5 // pred_region
      %s518 = ssub.s32 %s8, 2
      // Predicated region
      $region45: #{idmrf_loss.4} parent=43 // pred_check
        %p519 = pneg %p103
      $region46: #{idmrf_loss.4} parent=43 // pred_check_branch
        %521 = sbr.rel (%p519) target = $region48
      $region47: #{idmrf_loss.4} parent=43 // pred_region
        %p522 = scmp.lt.s32.totalorder %s19, 1
        %s523 = scalar_select %p522, %s19, 1
        %s524 = scalar_lea.vmem %s2, %s523
      $region48: #{idmrf_loss.4} parent=43 // pred_fallthru
        _
    $region44: #{idmrf_loss.4} parent=5 // pred_fallthru
      _
  $region6: #{idmrf_loss.4} parent=0 // loop_footer
    %s12 = sadd.s32 1, %s8
  $region7: #{idmrf_loss.4} parent=0 // loop_footer_branch
    %7 = sbr.rel target = $region3
  $region8: #{idmrf_loss.4} parent=0 // loop_exit
    _

// kernel: idmrf_loss.3
$region0: #{idmrf_loss.3}
  #allocation0 [shape = 'u32[]', space=smem, size = 0x4, offset = 0x4, fixed_abs, tag = 'smem constant byte address 0x4 - core index']
  #allocation1 [shape = 'u32[144,128]{1,0:T(1,128)}', space=vmem, size = 0x12000, scoped, tag = 'internal scratch']
  #allocation2 [shape = 'f32[256,1]{1,0:T(8,128)}', space=vmem, size = 0x20000, scoped, tag = 'scratch operand']
  %s0 = inlined_call_operand.vmem [shape: bf16[2,256,16], index: 0, kind: input, shape index: {}]
  %s1 = inlined_call_operand.vmem [shape: bf16[2,16,256], index: 1, kind: input, shape index: {}]
  %s2 = inlined_call_operand.vmem [shape: f32[2,1,1], index: 2, kind: output, shape index: {}]
  %s3 = sld [smem:[#allocation0]]
  $region49: #{idmrf_loss.3} parent=0
    _
  %s5 = ssub.s32 1, %s3
  %s6 = scalar_select 0, %s5, %s3
  loop: start=0, step=1, limit=4
  $region2: #{idmrf_loss.3} parent=0 // loop_pre_header
    _
  $region3: #{idmrf_loss.3} parent=0 // loop_header
    %s8 = sphi 0, %s12
    %p9 = scmp.ge.s32.totalorder %s8, 4
    %s15 = sphi 0, %s27
    %s16 = sphi 0, %s23
    %s17 = sphi 0, %s15
    %s18 = sphi 0, %s16
    %s19 = sphi 0, %s17
    %s20 = sphi 0, %s18
    %s30 = sphi 0, %s32
    %s33 = sphi 0, %s30
    %s34 = sphi 0, %s33
    %s50 = sphi 0, %s34
    %s58 = sphi 0, %s60
    %s61 = sphi 0, %s58
    %s62 = sphi 0, %s61
    %s78 = sphi 0, %s62
    %s84 = sphi 0, %s86
    %s87 = sphi 0, %s84
    %s88 = sphi 0, %s87
    %s104 = sphi 0, %s88
  $region4: #{idmrf_loss.3} parent=0 // loop_header_branch
    %11 = sbr.rel (%p9) target = $region8
  $region5: #{idmrf_loss.3} parent=0 // loop_body
    %s13 = ssub.s32 %s8, 1
    %s14 = ssub.s32 %s8, 2
    %s21 = sadd.s32 1, %s16
    %p22 = scmp.ge.s32.totalorder %s21, 1
    %s23 = scalar_select %p22, 0, %s21
    %s24 = sadd.s32 1, %s15
    %s25 = scalar_select %p22, %s24, %s15
    %p26 = scmp.ge.s32.totalorder %s25, 2
    %s27 = scalar_select %p26, 0, %s25
    %s28 = ssub.s32 %s15, %s27
    %p29 = scmp.eq.s32.totalorder %s28, 0
    %s31 = sadd.s32 %s30, 1
    %s32 = scalar_select %p29, %s30, %s31
    %p35 = pneg %p29
    %p36 = scmp.eq.s32.totalorder %s8, 1
    %p37 = por %p35, %p36
    %p38 = scmp.ne.s32.totalorder %s30, %s33
    %p39 = scmp.eq.s32.totalorder %s8, 0
    %p40 = por %p38, %p39
    %p41 = scmp.ne.s32.totalorder %s30, %s33
    %p42 = scmp.eq.s32.totalorder %s13, 1
    %p43 = por %p41, %p42
    %p44 = scmp.ne.s32.totalorder %s33, %s34
    %p45 = scmp.eq.s32.totalorder %s13, 0
    %p46 = por %p44, %p45
    %p47 = scmp.ne.s32.totalorder %s33, %s34
    %p48 = scmp.eq.s32.totalorder %s14, 1
    %p49 = por %p47, %p48
    %p51 = scmp.ne.s32.totalorder %s34, %s50
    %p52 = scmp.eq.s32.totalorder %s14, 0
    %p53 = por %p51, %p52
    %s54 = ssub.s32 %s15, %s27
    %s55 = ssub.s32 %s16, %s23
    %s56 = sor.u32 %s54, %s55
    %p57 = scmp.eq.s32.totalorder %s56, 0
    %s59 = sadd.s32 %s58, 1
    %s60 = scalar_select %p57, %s58, %s59
    %p63 = pneg %p57
    %p64 = scmp.eq.s32.totalorder %s8, 1
    %p65 = por %p63, %p64
    %p66 = scmp.ne.s32.totalorder %s58, %s61
    %p67 = scmp.eq.s32.totalorder %s8, 0
    %p68 = por %p66, %p67
    %p69 = scmp.ne.s32.totalorder %s58, %s61
    %p70 = scmp.eq.s32.totalorder %s13, 1
    %p71 = por %p69, %p70
    %p72 = scmp.ne.s32.totalorder %s61, %s62
    %p73 = scmp.eq.s32.totalorder %s13, 0
    %p74 = por %p72, %p73
    %p75 = scmp.ne.s32.totalorder %s61, %s62
    %p76 = scmp.eq.s32.totalorder %s14, 1
    %p77 = por %p75, %p76
    %p79 = scmp.ne.s32.totalorder %s62, %s78
    %p80 = scmp.eq.s32.totalorder %s14, 0
    %p81 = por %p79, %p80
    %s82 = ssub.s32 %s15, %s27
    %p83 = scmp.eq.s32.totalorder %s82, 0
    %s85 = sadd.s32 %s84, 1
    %s86 = scalar_select %p83, %s84, %s85
    %p89 = pneg %p83
    %p90 = scmp.eq.s32.totalorder %s8, 1
    %p91 = por %p89, %p90
    %p92 = scmp.ne.s32.totalorder %s84, %s87
    %p93 = scmp.eq.s32.totalorder %s8, 0
    %p94 = por %p92, %p93
    %p95 = scmp.ne.s32.totalorder %s84, %s87
    %p96 = scmp.eq.s32.totalorder %s13, 1
    %p97 = por %p95, %p96
    %p98 = scmp.ne.s32.totalorder %s87, %s88
    %p99 = scmp.eq.s32.totalorder %s13, 0
    %p100 = por %p98, %p99
    %p101 = scmp.ne.s32.totalorder %s87, %s88
    %p102 = scmp.eq.s32.totalorder %s14, 1
    %p103 = por %p101, %p102
    %p105 = scmp.ne.s32.totalorder %s88, %s104
    %p106 = scmp.eq.s32.totalorder %s14, 0
    %p107 = por %p105, %p106
    %p108 = scmp.le.s32.totalorder 1, %s8
    %p109 = scmp.lt.s32.totalorder %s8, 3
    %p110 = pnand %p108, %p109
    %p111 = pneg %p110
    // Predicated region
    $region9: #{idmrf_loss.3} parent=5 // pred_check
      _
    $region10: #{idmrf_loss.3} parent=5 // pred_check_branch
      %113 = sbr.rel (%p110) target = $region12
    $region11: #{idmrf_loss.3} parent=5 // pred_region
      %s114 = ssub.s32 %s8, 1
    $region12: #{idmrf_loss.3} parent=5 // pred_fallthru
      _
    %p115 = scmp.lt.s32.totalorder %s8, 2
    // Predicated region
    $region13: #{idmrf_loss.3} parent=5 // pred_check
      %p116 = pneg %p115
    $region14: #{idmrf_loss.3} parent=5 // pred_check_branch
      %118 = sbr.rel (%p116) target = $region16
    $region15: #{idmrf_loss.3} parent=5 // pred_region
      // Predicated region
      $region17: #{idmrf_loss.3} parent=15 // pred_check
        %p119 = pneg %p40
      $region18: #{idmrf_loss.3} parent=15 // pred_check_branch
        %121 = sbr.rel (%p119) target = $region20
      $region19: #{idmrf_loss.3} parent=15 // pred_region
        %p122 = scmp.lt.s32.totalorder %s15, 1
        %s123 = scalar_select %p122, %s15, 1
        %s124 = smul.addr %s123, 32
        %s125 = smul.addr %s124, 4
        %s126 = scalar_lea.vmem %s0, %s125
      $region20: #{idmrf_loss.3} parent=15 // pred_fallthru
        _
      // Predicated region
      $region21: #{idmrf_loss.3} parent=15 // pred_check
        %p127 = pneg %p68
      $region22: #{idmrf_loss.3} parent=15 // pred_check_branch
        %129 = sbr.rel (%p127) target = $region24
      $region23: #{idmrf_loss.3} parent=15 // pred_region
        %s130 = smul.u32 2, %s16
        %p131 = scmp.lt.s32.totalorder %s15, 1
        %s132 = scalar_select %p131, %s15, 1
        %p133 = scmp.lt.s32.totalorder %s130, 1
        %s134 = scalar_select %p133, %s130, 1
        %s135 = smul.addr %s132, 4
        %s136 = sadd.s32 %s134, %s135
        %s137 = smul.addr %s136, 4
        %s138 = scalar_lea.vmem %s1, %s137
        %s139 = smul.u32 2, %s16
      $region24: #{idmrf_loss.3} parent=15 // pred_fallthru
        _
    $region16: #{idmrf_loss.3} parent=5 // pred_fallthru
      _
    %p140 = scmp.le.s32.totalorder 1, %s8
    %p141 = scmp.lt.s32.totalorder %s8, 3
    %p142 = pnand %p140, %p141
    %p143 = pneg %p142
    // Predicated region
    $region25: #{idmrf_loss.3} parent=5 // pred_check
      _
    $region26: #{idmrf_loss.3} parent=5 // pred_check_branch
      %145 = sbr.rel (%p142) target = $region28
    $region27: #{idmrf_loss.3} parent=5 // pred_region
      %s146 = ssub.s32 %s8, 1
      %p147 = scmp.lt.s32.totalorder %s17, 1
      %s148 = scalar_select %p147, %s17, 1
      %s149 = smul.addr %s148, 32
      %s150 = smul.addr %s149, 4
      %s151 = scalar_lea.vmem %s0, %s150
      %p152 = pneg %p46
      %p153 = pneg %p43
      %s154 = smul.u32 2, %s18
      %p155 = scmp.lt.s32.totalorder %s17, 1
      %s156 = scalar_select %p155, %s17, 1
      %p157 = scmp.lt.s32.totalorder %s154, 1
      %s158 = scalar_select %p157, %s154, 1
      %s159 = smul.addr %s156, 4
      %s160 = sadd.s32 %s158, %s159
      %s161 = smul.addr %s160, 4
      %s162 = scalar_lea.vmem %s1, %s161
      %p163 = pneg %p74
      %p164 = pneg %p71
      %p165 = pneg %p100
      %p166 = pneg %p97
      %p167 = scmp.lt.s32.totalorder %s17, 1
      %s168 = scalar_select %p167, %s17, 1
      %s169 = scalar_lea.vmem %s2, %s168
      %p170 = scmp.lt.s32.totalorder %s17, 1
      %s171 = scalar_select %p170, %s17, 1
      %s172 = smul.addr %s171, 32
      %s173 = smul.addr %s172, 4
      %s174 = scalar_lea.vmem %s0, %s173
      %s175 = smul.u32 2, %s18
      %p176 = scmp.lt.s32.totalorder %s17, 1
      %s177 = scalar_select %p176, %s17, 1
      %p178 = scmp.lt.s32.totalorder %s175, 1
      %s179 = scalar_select %p178, %s175, 1
      %s180 = smul.addr %s177, 4
      %s181 = sadd.s32 %s179, %s180
      %s182 = smul.addr %s181, 4
      %s183 = scalar_lea.vmem %s1, %s182
      %s184 = smul.u32 2, %s18
      %p185 = scmp.lt.s32.totalorder %s17, 1
      %s186 = scalar_select %p185, %s17, 1
      %s187 = scalar_lea.vmem %s2, %s186
      %p189 = scmp.eq.s32.totalorder %s18, 0
      // Predicated region
      $region29: #{idmrf_loss.3} parent=27 // pred_check
        %p190 = pneg %p189
      $region30: #{idmrf_loss.3} parent=27 // pred_check_branch
        %192 = sbr.rel (%p190) target = $region32
      $region31: #{idmrf_loss.3} parent=27 // pred_region
        %vm193 = vcmask 7168
        %194 = vst.msk [vmem:[#allocation2] sm:$0xff] %vm193, 0.0
        %195 = vst.msk [vmem:[#allocation2 + $0x8] sm:$0xff] %vm193, 0.0
        %196 = vst.msk [vmem:[#allocation2 + $0x10] sm:$0xff] %vm193, 0.0
        %197 = vst.msk [vmem:[#allocation2 + $0x18] sm:$0xff] %vm193, 0.0
        %198 = vst.msk [vmem:[#allocation2 + $0x20] sm:$0xff] %vm193, 0.0
        %199 = vst.msk [vmem:[#allocation2 + $0x28] sm:$0xff] %vm193, 0.0
        %200 = vst.msk [vmem:[#allocation2 + $0x30] sm:$0xff] %vm193, 0.0
        %201 = vst.msk [vmem:[#allocation2 + $0x38] sm:$0xff] %vm193, 0.0
        %202 = vst.msk [vmem:[#allocation2 + $0x40] sm:$0xff] %vm193, 0.0
        %203 = vst.msk [vmem:[#allocation2 + $0x48] sm:$0xff] %vm193, 0.0
        %204 = vst.msk [vmem:[#allocation2 + $0x50] sm:$0xff] %vm193, 0.0
        %205 = vst.msk [vmem:[#allocation2 + $0x58] sm:$0xff] %vm193, 0.0
        %206 = vst.msk [vmem:[#allocation2 + $0x60] sm:$0xff] %vm193, 0.0
        %207 = vst.msk [vmem:[#allocation2 + $0x68] sm:$0xff] %vm193, 0.0
        %208 = vst.msk [vmem:[#allocation2 + $0x70] sm:$0xff] %vm193, 0.0
        %209 = vst.msk [vmem:[#allocation2 + $0x78] sm:$0xff] %vm193, 0.0
        %210 = vst.msk [vmem:[#allocation2 + $0x80] sm:$0xff] %vm193, 0.0
        %211 = vst.msk [vmem:[#allocation2 + $0x88] sm:$0xff] %vm193, 0.0
        %212 = vst.msk [vmem:[#allocation2 + $0x90] sm:$0xff] %vm193, 0.0
        %213 = vst.msk [vmem:[#allocation2 + $0x98] sm:$0xff] %vm193, 0.0
        %214 = vst.msk [vmem:[#allocation2 + $0xa0] sm:$0xff] %vm193, 0.0
        %215 = vst.msk [vmem:[#allocation2 + $0xa8] sm:$0xff] %vm193, 0.0
        %216 = vst.msk [vmem:[#allocation2 + $0xb0] sm:$0xff] %vm193, 0.0
        %217 = vst.msk [vmem:[#allocation2 + $0xb8] sm:$0xff] %vm193, 0.0
        %218 = vst.msk [vmem:[#allocation2 + $0xc0] sm:$0xff] %vm193, 0.0
        %219 = vst.msk [vmem:[#allocation2 + $0xc8] sm:$0xff] %vm193, 0.0
        %220 = vst.msk [vmem:[#allocation2 + $0xd0] sm:$0xff] %vm193, 0.0
        %221 = vst.msk [vmem:[#allocation2 + $0xd8] sm:$0xff] %vm193, 0.0
        %222 = vst.msk [vmem:[#allocation2 + $0xe0] sm:$0xff] %vm193, 0.0
        %223 = vst.msk [vmem:[#allocation2 + $0xe8] sm:$0xff] %vm193, 0.0
        %224 = vst.msk [vmem:[#allocation2 + $0xf0] sm:$0xff] %vm193, 0.0
        %225 = vst.msk [vmem:[#allocation2 + $0xf8] sm:$0xff] %vm193, 0.0
      $region32: #{idmrf_loss.3} parent=27 // pred_fallthru
        _
      %v226 = vld [vmem:[%s174] sm:$0xf]
      %v227 = vld [vmem:[%s174 + $0x4] sm:$0xf]
      %v228 = vld [vmem:[%s174 + $0x8] sm:$0xf]
      %v229 = vld [vmem:[%s174 + $0xc] sm:$0xf]
      %v230 = vld [vmem:[%s174 + $0x10] sm:$0xf]
      %v231 = vld [vmem:[%s174 + $0x14] sm:$0xf]
      %v232 = vld [vmem:[%s174 + $0x18] sm:$0xf]
      %v233 = vld [vmem:[%s174 + $0x1c] sm:$0xf]
      %v234 = vld [vmem:[%s174 + $0x20] sm:$0xf]
      %v235 = vld [vmem:[%s174 + $0x24] sm:$0xf]
      %v236 = vld [vmem:[%s174 + $0x28] sm:$0xf]
      %v237 = vld [vmem:[%s174 + $0x2c] sm:$0xf]
      %v238 = vld [vmem:[%s174 + $0x30] sm:$0xf]
      %v239 = vld [vmem:[%s174 + $0x34] sm:$0xf]
      %v240 = vld [vmem:[%s174 + $0x38] sm:$0xf]
      %v241 = vld [vmem:[%s174 + $0x3c] sm:$0xf]
      %v242 = vld [vmem:[%s174 + $0x40] sm:$0xf]
      %v243 = vld [vmem:[%s174 + $0x44] sm:$0xf]
      %v244 = vld [vmem:[%s174 + $0x48] sm:$0xf]
      %v245 = vld [vmem:[%s174 + $0x4c] sm:$0xf]
      %v246 = vld [vmem:[%s174 + $0x50] sm:$0xf]
      %v247 = vld [vmem:[%s174 + $0x54] sm:$0xf]
      %v248 = vld [vmem:[%s174 + $0x58] sm:$0xf]
      %v249 = vld [vmem:[%s174 + $0x5c] sm:$0xf]
      %v250 = vld [vmem:[%s174 + $0x60] sm:$0xf]
      %v251 = vld [vmem:[%s174 + $0x64] sm:$0xf]
      %v252 = vld [vmem:[%s174 + $0x68] sm:$0xf]
      %v253 = vld [vmem:[%s174 + $0x6c] sm:$0xf]
      %v254 = vld [vmem:[%s174 + $0x70] sm:$0xf]
      %v255 = vld [vmem:[%s174 + $0x74] sm:$0xf]
      %v256 = vld [vmem:[%s174 + $0x78] sm:$0xf]
      %v257 = vld [vmem:[%s174 + $0x7c] sm:$0xf]
      %v258 = vld [vmem:[%s183] sm:$0xff]
      %v259 = vld [vmem:[%s183 + $0x8] sm:$0xff]
      %v292 = vunpack.c.l.b16 %v226
      %v293 = vunpack.c.l.b16 %v227
      %v294 = vunpack.c.l.b16 %v228
      %v295 = vunpack.c.l.b16 %v229
      %v296 = vunpack.c.l.b16 %v230
      %v297 = vunpack.c.l.b16 %v231
      %v298 = vunpack.c.l.b16 %v232
      %v299 = vunpack.c.l.b16 %v233
      %v300 = vunpack.c.l.b16 %v234
      %v301 = vunpack.c.l.b16 %v235
      %v302 = vunpack.c.l.b16 %v236
      %v303 = vunpack.c.l.b16 %v237
      %v304 = vunpack.c.l.b16 %v238
      %v305 = vunpack.c.l.b16 %v239
      %v306 = vunpack.c.l.b16 %v240
      %v307 = vunpack.c.l.b16 %v241
      %v308 = vunpack.c.l.b16 %v242
      %v309 = vunpack.c.l.b16 %v243
      %v310 = vunpack.c.l.b16 %v244
      %v311 = vunpack.c.l.b16 %v245
      %v312 = vunpack.c.l.b16 %v246
      %v313 = vunpack.c.l.b16 %v247
      %v314 = vunpack.c.l.b16 %v248
      %v315 = vunpack.c.l.b16 %v249
      %v316 = vunpack.c.l.b16 %v250
      %v317 = vunpack.c.l.b16 %v251
      %v318 = vunpack.c.l.b16 %v252
      %v319 = vunpack.c.l.b16 %v253
      %v320 = vunpack.c.l.b16 %v254
      %v321 = vunpack.c.l.b16 %v255
      %v322 = vunpack.c.l.b16 %v256
      %v323 = vunpack.c.l.b16 %v257
      %v324 = vpack.c.b16 %v293, %v292
      %v325 = vpack.c.b16 %v295, %v294
      %v326 = vpack.c.b16 %v297, %v296
      %v327 = vpack.c.b16 %v299, %v298
      %v328 = vpack.c.b16 %v301, %v300
      %v329 = vpack.c.b16 %v303, %v302
      %v330 = vpack.c.b16 %v305, %v304
      %v331 = vpack.c.b16 %v307, %v306
      %v332 = vpack.c.b16 %v309, %v308
      %v333 = vpack.c.b16 %v311, %v310
      %v334 = vpack.c.b16 %v313, %v312
      %v335 = vpack.c.b16 %v315, %v314
      %v336 = vpack.c.b16 %v317, %v316
      %v337 = vpack.c.b16 %v319, %v318
      %v338 = vpack.c.b16 %v321, %v320
      %v339 = vpack.c.b16 %v323, %v322
      %v342 = vunpack.c.l.b16 %v258
      %v343 = vunpack.c.h.b16 %v258
      %v344 = vunpack.c.l.b16 %v259
      %v345 = vunpack.c.h.b16 %v259
      %v346 = vpack.c.b16 %v344, %v342
      %v347 = vpack.c.b16 %v345, %v343
      %vm350 = vcmask 130048
      %v352 = vsel %vm350, %v324, 0
      %v355 = vsel %vm350, %v325, 0
      %v358 = vsel %vm350, %v326, 0
      %v361 = vsel %vm350, %v327, 0
      %v364 = vsel %vm350, %v328, 0
      %v367 = vsel %vm350, %v329, 0
      %v370 = vsel %vm350, %v330, 0
      %v373 = vsel %vm350, %v331, 0
      %v376 = vsel %vm350, %v332, 0
      %v379 = vsel %vm350, %v333, 0
      %v382 = vsel %vm350, %v334, 0
      %v385 = vsel %vm350, %v335, 0
      %v388 = vsel %vm350, %v336, 0
      %v391 = vsel %vm350, %v337, 0
      %v394 = vsel %vm350, %v338, 0
      %v397 = vsel %vm350, %v339, 0
      %399 = vmatprep.subr.bf16.mxu0 0
      %400 = vmatpush1.bf16.msra.mxu0 0
      %401 = vmatprep.subr.bf16.mxu0 0
      %402 = vmatpush1.bf16.msra.mxu0 0
      %403 = vmatprep.subr.bf16.mxu0 0
      %404 = vmatpush1.bf16.msra.mxu0 0
      %405 = vmatprep.subr.bf16.mxu0 0
      %406 = vmatpush1.bf16.msra.mxu0 0
      %407 = vmatprep.subr.bf16.mxu0 0
      %408 = vmatpush1.bf16.msra.mxu0 0
      %409 = vmatprep.subr.bf16.mxu0 0
      %410 = vmatpush1.bf16.msra.mxu0 0
      %411 = vmatprep.subr.bf16.mxu0 0
      %412 = vmatpush1.bf16.msra.mxu0 0
      %413 = vmatprep.subr.bf16.mxu0 %v347
      %414 = vmatpush1.bf16.msra.mxu0 %v346
      %415 = vmatprep.subr.bf16.mxu0 0
      %416 = vmatpush2.bf16.msra.mxu0 0
      %417 = vmatprep.subr.bf16.mxu0 0
      %418 = vmatpush2.bf16.msra.mxu0 0
      %419 = vmatprep.subr.bf16.mxu0 0
      %420 = vmatpush2.bf16.msra.mxu0 0
      %421 = vmatprep.subr.bf16.mxu0 0
      %422 = vmatpush2.bf16.msra.mxu0 0
      %423 = vmatprep.subr.bf16.mxu0 0
      %424 = vmatpush2.bf16.msra.mxu0 0
      %425 = vmatprep.subr.bf16.mxu0 0
      %426 = vmatpush2.bf16.msra.mxu0 0
      %427 = vmatprep.subr.bf16.mxu0 0
      %428 = vmatpush2.bf16.msra.mxu0 0
      %429 = vmatprep.subr.bf16.mxu0 0
      %430 = vmatpush2.bf16.msra.mxu0 0
      %431 = vmatprep.mubr.bf16.mxu0 0
      %432 = vmatmul.mubr.bf16.gmra.mxu0 %v352
      %v433 = vpop.f32.mrf.mxu0
      %v434 = vadd.f32 0.0, %v433
      %v435 = vpop.f32.mrf.mxu0
      %v436 = vadd.f32 0.0, %v435
      %v437 = vpop.f32.mrf.mxu0
      %v438 = vadd.f32 0.0, %v437
      %v439 = vpop.f32.mrf.mxu0
      %v440 = vadd.f32 0.0, %v439
      %441 = vmatprep.mubr.bf16.mxu0 0
      %442 = vmatmul.mubr.bf16.gmra.mxu0 %v355
      %v443 = vpop.f32.mrf.mxu0
      %v444 = vadd.f32 0.0, %v443
      %v445 = vpop.f32.mrf.mxu0
      %v446 = vadd.f32 0.0, %v445
      %v447 = vpop.f32.mrf.mxu0
      %v448 = vadd.f32 0.0, %v447
      %v449 = vpop.f32.mrf.mxu0
      %v450 = vadd.f32 0.0, %v449
      %451 = vmatprep.mubr.bf16.mxu0 0
      %452 = vmatmul.mubr.bf16.gmra.mxu0 %v358
      %v453 = vpop.f32.mrf.mxu0
      %v454 = vadd.f32 0.0, %v453
      %v455 = vpop.f32.mrf.mxu0
      %v456 = vadd.f32 0.0, %v455
      %v457 = vpop.f32.mrf.mxu0
      %v458 = vadd.f32 0.0, %v457
      %v459 = vpop.f32.mrf.mxu0
      %v460 = vadd.f32 0.0, %v459
      %461 = vmatprep.mubr.bf16.mxu0 0
      %462 = vmatmul.mubr.bf16.gmra.mxu0 %v361
      %v463 = vpop.f32.mrf.mxu0
      %v464 = vadd.f32 0.0, %v463
      %v465 = vpop.f32.mrf.mxu0
      %v466 = vadd.f32 0.0, %v465
      %v467 = vpop.f32.mrf.mxu0
      %v468 = vadd.f32 0.0, %v467
      %v469 = vpop.f32.mrf.mxu0
      %v470 = vadd.f32 0.0, %v469
      %471 = vmatprep.mubr.bf16.mxu0 0
      %472 = vmatmul.mubr.bf16.gmra.mxu0 %v364
      %v473 = vpop.f32.mrf.mxu0
      %v474 = vadd.f32 0.0, %v473
      %v475 = vpop.f32.mrf.mxu0
      %v476 = vadd.f32 0.0, %v475
      %v477 = vpop.f32.mrf.mxu0
      %v478 = vadd.f32 0.0, %v477
      %v479 = vpop.f32.mrf.mxu0
      %v480 = vadd.f32 0.0, %v479
      %481 = vmatprep.mubr.bf16.mxu0 0
      %482 = vmatmul.mubr.bf16.gmra.mxu0 %v367
      %v483 = vpop.f32.mrf.mxu0
      %v484 = vadd.f32 0.0, %v483
      %v485 = vpop.f32.mrf.mxu0
      %v486 = vadd.f32 0.0, %v485
      %v487 = vpop.f32.mrf.mxu0
      %v488 = vadd.f32 0.0, %v487
      %v489 = vpop.f32.mrf.mxu0
      %v490 = vadd.f32 0.0, %v489
      %491 = vmatprep.mubr.bf16.mxu0 0
      %492 = vmatmul.mubr.bf16.gmra.mxu0 %v370
      %v493 = vpop.f32.mrf.mxu0
      %v494 = vadd.f32 0.0, %v493
      %v495 = vpop.f32.mrf.mxu0
      %v496 = vadd.f32 0.0, %v495
      %v497 = vpop.f32.mrf.mxu0
      %v498 = vadd.f32 0.0, %v497
      %v499 = vpop.f32.mrf.mxu0
      %v500 = vadd.f32 0.0, %v499
      %501 = vmatprep.mubr.bf16.mxu0 0
      %502 = vmatmul.mubr.bf16.gmra.mxu0 %v373
      %v503 = vpop.f32.mrf.mxu0
      %v504 = vadd.f32 0.0, %v503
      %v505 = vpop.f32.mrf.mxu0
      %v506 = vadd.f32 0.0, %v505
      %v507 = vpop.f32.mrf.mxu0
      %v508 = vadd.f32 0.0, %v507
      %v509 = vpop.f32.mrf.mxu0
      %v510 = vadd.f32 0.0, %v509
      %511 = vmatprep.mubr.bf16.mxu0 0
      %512 = vmatmul.mubr.bf16.gmra.mxu0 %v376
      %v513 = vpop.f32.mrf.mxu0
      %v514 = vadd.f32 0.0, %v513
      %v515 = vpop.f32.mrf.mxu0
      %v516 = vadd.f32 0.0, %v515
      %v517 = vpop.f32.mrf.mxu0
      %v518 = vadd.f32 0.0, %v517
      %v519 = vpop.f32.mrf.mxu0
      %v520 = vadd.f32 0.0, %v519
      %521 = vmatprep.mubr.bf16.mxu0 0
      %522 = vmatmul.mubr.bf16.gmra.mxu0 %v379
      %v523 = vpop.f32.mrf.mxu0
      %v524 = vadd.f32 0.0, %v523
      %v525 = vpop.f32.mrf.mxu0
      %v526 = vadd.f32 0.0, %v525
      %v527 = vpop.f32.mrf.mxu0
      %v528 = vadd.f32 0.0, %v527
      %v529 = vpop.f32.mrf.mxu0
      %v530 = vadd.f32 0.0, %v529
      %531 = vmatprep.mubr.bf16.mxu0 0
      %532 = vmatmul.mubr.bf16.gmra.mxu0 %v382
      %v533 = vpop.f32.mrf.mxu0
      %v534 = vadd.f32 0.0, %v533
      %v535 = vpop.f32.mrf.mxu0
      %v536 = vadd.f32 0.0, %v535
      %v537 = vpop.f32.mrf.mxu0
      %v538 = vadd.f32 0.0, %v537
      %v539 = vpop.f32.mrf.mxu0
      %v540 = vadd.f32 0.0, %v539
      %541 = vmatprep.mubr.bf16.mxu0 0
      %542 = vmatmul.mubr.bf16.gmra.mxu0 %v385
      %v543 = vpop.f32.mrf.mxu0
      %v544 = vadd.f32 0.0, %v543
      %v545 = vpop.f32.mrf.mxu0
      %v546 = vadd.f32 0.0, %v545
      %v547 = vpop.f32.mrf.mxu0
      %v548 = vadd.f32 0.0, %v547
      %v549 = vpop.f32.mrf.mxu0
      %v550 = vadd.f32 0.0, %v549
      %551 = vmatprep.mubr.bf16.mxu0 0
      %552 = vmatmul.mubr.bf16.gmra.mxu0 %v388
      %v553 = vpop.f32.mrf.mxu0
      %v554 = vadd.f32 0.0, %v553
      %v555 = vpop.f32.mrf.mxu0
      %v556 = vadd.f32 0.0, %v555
      %v557 = vpop.f32.mrf.mxu0
      %v558 = vadd.f32 0.0, %v557
      %v559 = vpop.f32.mrf.mxu0
      %v560 = vadd.f32 0.0, %v559
      %561 = vmatprep.mubr.bf16.mxu0 0
      %562 = vmatmul.mubr.bf16.gmra.mxu0 %v391
      %v563 = vpop.f32.mrf.mxu0
      %v564 = vadd.f32 0.0, %v563
      %v565 = vpop.f32.mrf.mxu0
      %v566 = vadd.f32 0.0, %v565
      %v567 = vpop.f32.mrf.mxu0
      %v568 = vadd.f32 0.0, %v567
      %v569 = vpop.f32.mrf.mxu0
      %v570 = vadd.f32 0.0, %v569
      %571 = vmatprep.mubr.bf16.mxu0 0
      %572 = vmatmul.mubr.bf16.gmra.mxu0 %v394
      %v573 = vpop.f32.mrf.mxu0
      %v574 = vadd.f32 0.0, %v573
      %v575 = vpop.f32.mrf.mxu0
      %v576 = vadd.f32 0.0, %v575
      %v577 = vpop.f32.mrf.mxu0
      %v578 = vadd.f32 0.0, %v577
      %v579 = vpop.f32.mrf.mxu0
      %v580 = vadd.f32 0.0, %v579
      %581 = vmatprep.mubr.bf16.mxu0 0
      %582 = vmatmul.mubr.bf16.gmra.mxu0 %v397
      %v583 = vpop.f32.mrf.mxu0
      %v584 = vadd.f32 0.0, %v583
      %v585 = vpop.f32.mrf.mxu0
      %v586 = vadd.f32 0.0, %v585
      %v587 = vpop.f32.mrf.mxu0
      %v588 = vadd.f32 0.0, %v587
      %v589 = vpop.f32.mrf.mxu0
      %v590 = vadd.f32 0.0, %v589
      %591 = vdwg.mxu0
      %v592 = vmax.f32 %v434, %v444
      %v593 = vmax.f32 %v438, %v448
      %v594 = vmax.f32 %v592, %v454
      %v595 = vmax.f32 %v593, %v458
      %v596 = vmax.f32 %v594, %v464
      %v597 = vmax.f32 %v595, %v468
      %v598 = vmax.f32 %v596, %v474
      %v599 = vmax.f32 %v597, %v478
      %v600 = vmax.f32 %v598, %v484
      %v601 = vmax.f32 %v599, %v488
      %v602 = vmax.f32 %v600, %v494
      %v603 = vmax.f32 %v601, %v498
      %v604 = vmax.f32 %v602, %v504
      %v605 = vmax.f32 %v603, %v508
      %v606 = vmax.f32 %v604, %v514
      %v607 = vmax.f32 %v605, %v518
      %v608 = vmax.f32 %v606, %v524
      %v609 = vmax.f32 %v607, %v528
      %v610 = vmax.f32 %v608, %v534
      %v611 = vmax.f32 %v609, %v538
      %v612 = vmax.f32 %v610, %v544
      %v613 = vmax.f32 %v611, %v548
      %v614 = vmax.f32 %v612, %v554
      %v615 = vmax.f32 %v613, %v558
      %v616 = vmax.f32 %v614, %v564
      %v617 = vmax.f32 %v615, %v568
      %v618 = vmax.f32 %v616, %v574
      %v619 = vmax.f32 %v617, %v578
      %v620 = vmax.f32 %v618, %v584
      %v621 = vmax.f32 %v619, %v588
      %v622 = vmax.f32 %v620, %v621
      %v623 = vrot.slane %v622, 4
      %v624 = vmax.f32 %v622, %v623
      %v625 = vrot.slane %v624, 2
      %v626 = vmax.f32 %v624, %v625
      %v627 = vrot.slane %v626, 1
      %v628 = vmax.f32 %v626, %v627
      %v629 = vmax.f32 %v436, %v446
      %v630 = vmax.f32 %v440, %v450
      %v631 = vmax.f32 %v629, %v456
      %v632 = vmax.f32 %v630, %v460
      %v633 = vmax.f32 %v631, %v466
      %v634 = vmax.f32 %v632, %v470
      %v635 = vmax.f32 %v633, %v476
      %v636 = vmax.f32 %v634, %v480
      %v637 = vmax.f32 %v635, %v486
      %v638 = vmax.f32 %v636, %v490
      %v639 = vmax.f32 %v637, %v496
      %v640 = vmax.f32 %v638, %v500
      %v641 = vmax.f32 %v639, %v506
      %v642 = vmax.f32 %v640, %v510
      %v643 = vmax.f32 %v641, %v516
      %v644 = vmax.f32 %v642, %v520
      %v645 = vmax.f32 %v643, %v526
      %v646 = vmax.f32 %v644, %v530
      %v647 = vmax.f32 %v645, %v536
      %v648 = vmax.f32 %v646, %v540
      %v649 = vmax.f32 %v647, %v546
      %v650 = vmax.f32 %v648, %v550
      %v651 = vmax.f32 %v649, %v556
      %v652 = vmax.f32 %v650, %v560
      %v653 = vmax.f32 %v651, %v566
      %v654 = vmax.f32 %v652, %v570
      %v655 = vmax.f32 %v653, %v576
      %v656 = vmax.f32 %v654, %v580
      %v657 = vmax.f32 %v655, %v586
      %v658 = vmax.f32 %v656, %v590
      %v659 = vmax.f32 %v657, %v658
      %v660 = vrot.slane %v659, 4
      %v661 = vmax.f32 %v659, %v660
      %v662 = vrot.slane %v661, 2
      %v663 = vmax.f32 %v661, %v662
      %v664 = vrot.slane %v663, 1
      %v665 = vmax.f32 %v663, %v664
      %v666 = vmul.f32 %v628, 0.5
      %v667 = vmul.f32 %v665, 0.5
      %v668 = vsub.f32 0.5, %v666
      %v669 = vsub.f32 0.5, %v667
      %vm670 = vcmp.lt.f32.partialorder %v668, 0.001
      %vm671 = vcmp.lt.f32.partialorder %v669, 0.001
      %v672 = vadd.f32 %v668, 0.001
      %v673 = vadd.f32 %v669, 0.001
      %v674 = vsel %vm670, %v672, %v668
      %v675 = vsel %vm671, %v673, %v669
      %v676 = vrcp.pop %v674
      %v677 = vmul.f32 0.99998, %v676
      %v678 = vrcp.pop %v675
      %v679 = vmul.f32 0.99998, %v678
      %v680 = vsub.f32 1.99996, %v677
      %v681 = vsub.f32 1.99996, %v679
      %v682 = vmul.f32 %v434, %v677
      %v683 = vmul.f32 %v436, %v679
      %v684 = vmul.f32 %v438, %v677
      %v685 = vmul.f32 %v440, %v679
      %v686 = vmul.f32 %v444, %v677
      %v687 = vmul.f32 %v446, %v679
      %v688 = vmul.f32 %v448, %v677
      %v689 = vmul.f32 %v450, %v679
      %v690 = vmul.f32 %v454, %v677
      %v691 = vmul.f32 %v456, %v679
      %v692 = vmul.f32 %v458, %v677
      %v693 = vmul.f32 %v460, %v679
      %v694 = vmul.f32 %v464, %v677
      %v695 = vmul.f32 %v466, %v679
      %v696 = vmul.f32 %v468, %v677
      %v697 = vmul.f32 %v470, %v679
      %v698 = vmul.f32 %v474, %v677
      %v699 = vmul.f32 %v476, %v679
      %v700 = vmul.f32 %v478, %v677
      %v701 = vmul.f32 %v480, %v679
      %v702 = vmul.f32 %v484, %v677
      %v703 = vmul.f32 %v486, %v679
      %v704 = vmul.f32 %v488, %v677
      %v705 = vmul.f32 %v490, %v679
      %v706 = vmul.f32 %v494, %v677
      %v707 = vmul.f32 %v496, %v679
      %v708 = vmul.f32 %v498, %v677
      %v709 = vmul.f32 %v500, %v679
      %v710 = vmul.f32 %v504, %v677
      %v711 = vmul.f32 %v506, %v679
      %v712 = vmul.f32 %v508, %v677
      %v713 = vmul.f32 %v510, %v679
      %v714 = vmul.f32 %v514, %v677
      %v715 = vmul.f32 %v516, %v679
      %v716 = vmul.f32 %v518, %v677
      %v717 = vmul.f32 %v520, %v679
      %v718 = vmul.f32 %v524, %v677
      %v719 = vmul.f32 %v526, %v679
      %v720 = vmul.f32 %v528, %v677
      %v721 = vmul.f32 %v530, %v679
      %v722 = vmul.f32 %v534, %v677
      %v723 = vmul.f32 %v536, %v679
      %v724 = vmul.f32 %v538, %v677
      %v725 = vmul.f32 %v540, %v679
      %v726 = vmul.f32 %v544, %v677
      %v727 = vmul.f32 %v546, %v679
      %v728 = vmul.f32 %v548, %v677
      %v729 = vmul.f32 %v550, %v679
      %v730 = vmul.f32 %v554, %v677
      %v731 = vmul.f32 %v556, %v679
      %v732 = vmul.f32 %v558, %v677
      %v733 = vmul.f32 %v560, %v679
      %v734 = vmul.f32 %v564, %v677
      %v735 = vmul.f32 %v566, %v679
      %v736 = vmul.f32 %v568, %v677
      %v737 = vmul.f32 %v570, %v679
      %v738 = vmul.f32 %v574, %v677
      %v739 = vmul.f32 %v576, %v679
      %v740 = vmul.f32 %v578, %v677
      %v741 = vmul.f32 %v580, %v679
      %v742 = vmul.f32 %v584, %v677
      %v743 = vmul.f32 %v586, %v679
      %v744 = vmul.f32 %v588, %v677
      %v745 = vmul.f32 %v590, %v679
      %v746 = vadd.f32 %v682, %v680
      %v747 = vadd.f32 %v683, %v681
      %v748 = vadd.f32 %v684, %v680
      %v749 = vadd.f32 %v685, %v681
      %v750 = vadd.f32 %v686, %v680
      %v751 = vadd.f32 %v687, %v681
      %v752 = vadd.f32 %v688, %v680
      %v753 = vadd.f32 %v689, %v681
      %v754 = vadd.f32 %v690, %v680
      %v755 = vadd.f32 %v691, %v681
      %v756 = vadd.f32 %v692, %v680
      %v757 = vadd.f32 %v693, %v681
      %v758 = vadd.f32 %v694, %v680
      %v759 = vadd.f32 %v695, %v681
      %v760 = vadd.f32 %v696, %v680
      %v761 = vadd.f32 %v697, %v681
      %v762 = vadd.f32 %v698, %v680
      %v763 = vadd.f32 %v699, %v681
      %v764 = vadd.f32 %v700, %v680
      %v765 = vadd.f32 %v701, %v681
      %v766 = vadd.f32 %v702, %v680
      %v767 = vadd.f32 %v703, %v681
      %v768 = vadd.f32 %v704, %v680
      %v769 = vadd.f32 %v705, %v681
      %v770 = vadd.f32 %v706, %v680
      %v771 = vadd.f32 %v707, %v681
      %v772 = vadd.f32 %v708, %v680
      %v773 = vadd.f32 %v709, %v681
      %v774 = vadd.f32 %v710, %v680
      %v775 = vadd.f32 %v711, %v681
      %v776 = vadd.f32 %v712, %v680
      %v777 = vadd.f32 %v713, %v681
      %v778 = vadd.f32 %v714, %v680
      %v779 = vadd.f32 %v715, %v681
      %v780 = vadd.f32 %v716, %v680
      %v781 = vadd.f32 %v717, %v681
      %v782 = vadd.f32 %v718, %v680
      %v783 = vadd.f32 %v719, %v681
      %v784 = vadd.f32 %v720, %v680
      %v785 = vadd.f32 %v721, %v681
      %v786 = vadd.f32 %v722, %v680
      %v787 = vadd.f32 %v723, %v681
      %v788 = vadd.f32 %v724, %v680
      %v789 = vadd.f32 %v725, %v681
      %v790 = vadd.f32 %v726, %v680
      %v791 = vadd.f32 %v727, %v681
      %v792 = vadd.f32 %v728, %v680
      %v793 = vadd.f32 %v729, %v681
      %v794 = vadd.f32 %v730, %v680
      %v795 = vadd.f32 %v731, %v681
      %v796 = vadd.f32 %v732, %v680
      %v797 = vadd.f32 %v733, %v681
      %v798 = vadd.f32 %v734, %v680
      %v799 = vadd.f32 %v735, %v681
      %v800 = vadd.f32 %v736, %v680
      %v801 = vadd.f32 %v737, %v681
      %v802 = vadd.f32 %v738, %v680
      %v803 = vadd.f32 %v739, %v681
      %v804 = vadd.f32 %v740, %v680
      %v805 = vadd.f32 %v741, %v681
      %v806 = vadd.f32 %v742, %v680
      %v807 = vadd.f32 %v743, %v681
      %v808 = vadd.f32 %v744, %v680
      %v809 = vadd.f32 %v745, %v681
      %v810 = vmul.f32 %v746, 1.442695
      %v811 = vpow.pop %v810
      %v812 = vmul.f32 %v747, 1.442695
      %v813 = vpow.pop %v812
      %v814 = vmul.f32 %v748, 1.442695
      %v815 = vpow.pop %v814
      %v816 = vmul.f32 %v749, 1.442695
      %v817 = vpow.pop %v816
      %v818 = vmul.f32 %v750, 1.442695
      %v819 = vpow.pop %v818
      %v820 = vmul.f32 %v751, 1.442695
      %v821 = vpow.pop %v820
      %v822 = vmul.f32 %v752, 1.442695
      %v823 = vpow.pop %v822
      %v824 = vmul.f32 %v753, 1.442695
      %v825 = vpow.pop %v824
      %v826 = vmul.f32 %v754, 1.442695
      %v827 = vpow.pop %v826
      %v828 = vmul.f32 %v755, 1.442695
      %v829 = vpow.pop %v828
      %v830 = vmul.f32 %v756, 1.442695
      %v831 = vpow.pop %v830
      %v832 = vmul.f32 %v757, 1.442695
      %v833 = vpow.pop %v832
      %v834 = vmul.f32 %v758, 1.442695
      %v835 = vpow.pop %v834
      %v836 = vmul.f32 %v759, 1.442695
      %v837 = vpow.pop %v836
      %v838 = vmul.f32 %v760, 1.442695
      %v839 = vpow.pop %v838
      %v840 = vmul.f32 %v761, 1.442695
      %v841 = vpow.pop %v840
      %v842 = vmul.f32 %v762, 1.442695
      %v843 = vpow.pop %v842
      %v844 = vmul.f32 %v763, 1.442695
      %v845 = vpow.pop %v844
      %v846 = vmul.f32 %v764, 1.442695
      %v847 = vpow.pop %v846
      %v848 = vmul.f32 %v765, 1.442695
      %v849 = vpow.pop %v848
      %v850 = vmul.f32 %v766, 1.442695
      %v851 = vpow.pop %v850
      %v852 = vmul.f32 %v767, 1.442695
      %v853 = vpow.pop %v852
      %v854 = vmul.f32 %v768, 1.442695
      %v855 = vpow.pop %v854
      %v856 = vmul.f32 %v769, 1.442695
      %v857 = vpow.pop %v856
      %v858 = vmul.f32 %v770, 1.442695
      %v859 = vpow.pop %v858
      %v860 = vmul.f32 %v771, 1.442695
      %v861 = vpow.pop %v860
      %v862 = vmul.f32 %v772, 1.442695
      %v863 = vpow.pop %v862
      %v864 = vmul.f32 %v773, 1.442695
      %v865 = vpow.pop %v864
      %v866 = vmul.f32 %v774, 1.442695
      %v867 = vpow.pop %v866
      %v868 = vmul.f32 %v775, 1.442695
      %v869 = vpow.pop %v868
      %v870 = vmul.f32 %v776, 1.442695
      %v871 = vpow.pop %v870
      %v872 = vmul.f32 %v777, 1.442695
      %v873 = vpow.pop %v872
      %v874 = vmul.f32 %v778, 1.442695
      %v875 = vpow.pop %v874
      %v876 = vmul.f32 %v779, 1.442695
      %v877 = vpow.pop %v876
      %v878 = vmul.f32 %v780, 1.442695
      %v879 = vpow.pop %v878
      %v880 = vmul.f32 %v781, 1.442695
      %v881 = vpow.pop %v880
      %v882 = vmul.f32 %v782, 1.442695
      %v883 = vpow.pop %v882
      %v884 = vmul.f32 %v783, 1.442695
      %v885 = vpow.pop %v884
      %v886 = vmul.f32 %v784, 1.442695
      %v887 = vpow.pop %v886
      %v888 = vmul.f32 %v785, 1.442695
      %v889 = vpow.pop %v888
      %v890 = vmul.f32 %v786, 1.442695
      %v891 = vpow.pop %v890
      %v892 = vmul.f32 %v787, 1.442695
      %v893 = vpow.pop %v892
      %v894 = vmul.f32 %v788, 1.442695
      %v895 = vpow.pop %v894
      %v896 = vmul.f32 %v789, 1.442695
      %v897 = vpow.pop %v896
      %v898 = vmul.f32 %v790, 1.442695
      %v899 = vpow.pop %v898
      %v900 = vmul.f32 %v791, 1.442695
      %v901 = vpow.pop %v900
      %v902 = vmul.f32 %v792, 1.442695
      %v903 = vpow.pop %v902
      %v904 = vmul.f32 %v793, 1.442695
      %v905 = vpow.pop %v904
      %v906 = vmul.f32 %v794, 1.442695
      %v907 = vpow.pop %v906
      %v908 = vmul.f32 %v795, 1.442695
      %v909 = vpow.pop %v908
      %v910 = vmul.f32 %v796, 1.442695
      %v911 = vpow.pop %v910
      %v912 = vmul.f32 %v797, 1.442695
      %v913 = vpow.pop %v912
      %v914 = vmul.f32 %v798, 1.442695
      %v915 = vpow.pop %v914
      %v916 = vmul.f32 %v799, 1.442695
      %v917 = vpow.pop %v916
      %v918 = vmul.f32 %v800, 1.442695
      %v919 = vpow.pop %v918
      %v920 = vmul.f32 %v801, 1.442695
      %v921 = vpow.pop %v920
      %v922 = vmul.f32 %v802, 1.442695
      %v923 = vpow.pop %v922
      %v924 = vmul.f32 %v803, 1.442695
      %v925 = vpow.pop %v924
      %v926 = vmul.f32 %v804, 1.442695
      %v927 = vpow.pop %v926
      %v928 = vmul.f32 %v805, 1.442695
      %v929 = vpow.pop %v928
      %v930 = vmul.f32 %v806, 1.442695
      %v931 = vpow.pop %v930
      %v932 = vmul.f32 %v807, 1.442695
      %v933 = vpow.pop %v932
      %v934 = vmul.f32 %v808, 1.442695
      %v935 = vpow.pop %v934
      %v936 = vmul.f32 %v809, 1.442695
      %v937 = vpow.pop %v936
      %v938 = vadd.f32 %v811, %v815
      %v939 = vadd.f32 %v938, %v819
      %v940 = vadd.f32 %v939, %v823
      %v941 = vadd.f32 %v940, %v827
      %v942 = vadd.f32 %v941, %v831
      %v943 = vadd.f32 %v942, %v835
      %v944 = vadd.f32 %v943, %v839
      %v945 = vadd.f32 %v944, %v843
      %v946 = vadd.f32 %v945, %v847
      %v947 = vadd.f32 %v946, %v851
      %v948 = vadd.f32 %v947, %v855
      %v949 = vadd.f32 %v948, %v859
      %v950 = vadd.f32 %v949, %v863
      %v951 = vadd.f32 %v950, %v867
      %v952 = vadd.f32 %v951, %v871
      %v953 = vadd.f32 %v952, %v875
      %v954 = vadd.f32 %v953, %v879
      %v955 = vadd.f32 %v954, %v883
      %v956 = vadd.f32 %v955, %v887
      %v957 = vadd.f32 %v956, %v891
      %v958 = vadd.f32 %v957, %v895
      %v959 = vadd.f32 %v958, %v899
      %v960 = vadd.f32 %v959, %v903
      %v961 = vadd.f32 %v960, %v907
      %v962 = vadd.f32 %v961, %v911
      %v963 = vadd.f32 %v962, %v915
      %v964 = vadd.f32 %v963, %v919
      %v965 = vadd.f32 %v964, %v923
      %v966 = vadd.f32 %v965, %v927
      %v967 = vadd.f32 %v966, %v931
      %v968 = vadd.f32 %v967, %v935
      %v969 = vrot.slane %v968, 4
      %v970 = vadd.f32 %v968, %v969
      %v971 = vrot.slane %v970, 2
      %v972 = vadd.f32 %v970, %v971
      %v973 = vrot.slane %v972, 1
      %v974 = vadd.f32 %v972, %v973
      %v975 = vadd.f32 %v813, %v817
      %v976 = vadd.f32 %v975, %v821
      %v977 = vadd.f32 %v976, %v825
      %v978 = vadd.f32 %v977, %v829
      %v979 = vadd.f32 %v978, %v833
      %v980 = vadd.f32 %v979, %v837
      %v981 = vadd.f32 %v980, %v841
      %v982 = vadd.f32 %v981, %v845
      %v983 = vadd.f32 %v982, %v849
      %v984 = vadd.f32 %v983, %v853
      %v985 = vadd.f32 %v984, %v857
      %v986 = vadd.f32 %v985, %v861
      %v987 = vadd.f32 %v986, %v865
      %v988 = vadd.f32 %v987, %v869
      %v989 = vadd.f32 %v988, %v873
      %v990 = vadd.f32 %v989, %v877
      %v991 = vadd.f32 %v990, %v881
      %v992 = vadd.f32 %v991, %v885
      %v993 = vadd.f32 %v992, %v889
      %v994 = vadd.f32 %v993, %v893
      %v995 = vadd.f32 %v994, %v897
      %v996 = vadd.f32 %v995, %v901
      %v997 = vadd.f32 %v996, %v905
      %v998 = vadd.f32 %v997, %v909
      %v999 = vadd.f32 %v998, %v913
      %v1000 = vadd.f32 %v999, %v917
      %v1001 = vadd.f32 %v1000, %v921
      %v1002 = vadd.f32 %v1001, %v925
      %v1003 = vadd.f32 %v1002, %v929
      %v1004 = vadd.f32 %v1003, %v933
      %v1005 = vadd.f32 %v1004, %v937
      %v1006 = vrot.slane %v1005, 4
      %v1007 = vadd.f32 %v1005, %v1006
      %v1008 = vrot.slane %v1007, 2
      %v1009 = vadd.f32 %v1007, %v1008
      %v1010 = vrot.slane %v1009, 1
      %v1011 = vadd.f32 %v1009, %v1010
      %v1012 = vadd.f32 %v974, 1e-06
      %v1013 = vadd.f32 %v1011, 1e-06
      %v1014 = vrcp.pop %v1012
      %v1015 = vrcp.pop %v1013
      %v1016 = vmul.f32 %v811, %v1014
      %v1017 = vmul.f32 %v813, %v1015
      %v1018 = vmul.f32 %v815, %v1014
      %v1019 = vmul.f32 %v817, %v1015
      %v1020 = vmul.f32 %v819, %v1014
      %v1021 = vmul.f32 %v821, %v1015
      %v1022 = vmul.f32 %v823, %v1014
      %v1023 = vmul.f32 %v825, %v1015
      %v1024 = vmul.f32 %v827, %v1014
      %v1025 = vmul.f32 %v829, %v1015
      %v1026 = vmul.f32 %v831, %v1014
      %v1027 = vmul.f32 %v833, %v1015
      %v1028 = vmul.f32 %v835, %v1014
      %v1029 = vmul.f32 %v837, %v1015
      %v1030 = vmul.f32 %v839, %v1014
      %v1031 = vmul.f32 %v841, %v1015
      %v1032 = vmul.f32 %v843, %v1014
      %v1033 = vmul.f32 %v845, %v1015
      %v1034 = vmul.f32 %v847, %v1014
      %v1035 = vmul.f32 %v849, %v1015
      %v1036 = vmul.f32 %v851, %v1014
      %v1037 = vmul.f32 %v853, %v1015
      %v1038 = vmul.f32 %v855, %v1014
      %v1039 = vmul.f32 %v857, %v1015
      %v1040 = vmul.f32 %v859, %v1014
      %v1041 = vmul.f32 %v861, %v1015
      %v1042 = vmul.f32 %v863, %v1014
      %v1043 = vmul.f32 %v865, %v1015
      %v1044 = vmul.f32 %v867, %v1014
      %v1045 = vmul.f32 %v869, %v1015
      %v1046 = vmul.f32 %v871, %v1014
      %v1047 = vmul.f32 %v873, %v1015
      %v1048 = vmul.f32 %v875, %v1014
      %v1049 = vmul.f32 %v877, %v1015
      %v1050 = vmul.f32 %v879, %v1014
      %v1051 = vmul.f32 %v881, %v1015
      %v1052 = vmul.f32 %v883, %v1014
      %v1053 = vmul.f32 %v885, %v1015
      %v1054 = vmul.f32 %v887, %v1014
      %v1055 = vmul.f32 %v889, %v1015
      %v1056 = vmul.f32 %v891, %v1014
      %v1057 = vmul.f32 %v893, %v1015
      %v1058 = vmul.f32 %v895, %v1014
      %v1059 = vmul.f32 %v897, %v1015
      %v1060 = vmul.f32 %v899, %v1014
      %v1061 = vmul.f32 %v901, %v1015
      %v1062 = vmul.f32 %v903, %v1014
      %v1063 = vmul.f32 %v905, %v1015
      %v1064 = vmul.f32 %v907, %v1014
      %v1065 = vmul.f32 %v909, %v1015
      %v1066 = vmul.f32 %v911, %v1014
      %v1067 = vmul.f32 %v913, %v1015
      %v1068 = vmul.f32 %v915, %v1014
      %v1069 = vmul.f32 %v917, %v1015
      %v1070 = vmul.f32 %v919, %v1014
      %v1071 = vmul.f32 %v921, %v1015
      %v1072 = vmul.f32 %v923, %v1014
      %v1073 = vmul.f32 %v925, %v1015
      %v1074 = vmul.f32 %v927, %v1014
      %v1075 = vmul.f32 %v929, %v1015
      %v1076 = vmul.f32 %v931, %v1014
      %v1077 = vmul.f32 %v933, %v1015
      %v1078 = vmul.f32 %v935, %v1014
      %v1079 = vmul.f32 %v937, %v1015
      %v1080 = vmax.f32 %v1016, %v1017
      %1081 = vmax.xlane.f32.xlu0 %v1080
      %v1082 = vpop.xlane.xlu0 %1081
      %v1083 = vmax.f32 %v1018, %v1019
      %1084 = vmax.xlane.f32.xlu0 %v1083
      %v1085 = vpop.xlane.xlu0 %1084
      %v1086 = vmax.f32 %v1020, %v1021
      %1087 = vmax.xlane.f32.xlu0 %v1086
      %v1088 = vpop.xlane.xlu0 %1087
      %v1089 = vmax.f32 %v1022, %v1023
      %1090 = vmax.xlane.f32.xlu0 %v1089
      %v1091 = vpop.xlane.xlu0 %1090
      %v1092 = vmax.f32 %v1024, %v1025
      %1093 = vmax.xlane.f32.xlu0 %v1092
      %v1094 = vpop.xlane.xlu0 %1093
      %v1095 = vmax.f32 %v1026, %v1027
      %1096 = vmax.xlane.f32.xlu0 %v1095
      %v1097 = vpop.xlane.xlu0 %1096
      %v1098 = vmax.f32 %v1028, %v1029
      %1099 = vmax.xlane.f32.xlu0 %v1098
      %v1100 = vpop.xlane.xlu0 %1099
      %v1101 = vmax.f32 %v1030, %v1031
      %1102 = vmax.xlane.f32.xlu0 %v1101
      %v1103 = vpop.xlane.xlu0 %1102
      %v1104 = vmax.f32 %v1032, %v1033
      %1105 = vmax.xlane.f32.xlu0 %v1104
      %v1106 = vpop.xlane.xlu0 %1105
      %v1107 = vmax.f32 %v1034, %v1035
      %1108 = vmax.xlane.f32.xlu0 %v1107
      %v1109 = vpop.xlane.xlu0 %1108
      %v1110 = vmax.f32 %v1036, %v1037
      %1111 = vmax.xlane.f32.xlu0 %v1110
      %v1112 = vpop.xlane.xlu0 %1111
      %v1113 = vmax.f32 %v1038, %v1039
      %1114 = vmax.xlane.f32.xlu0 %v1113
      %v1115 = vpop.xlane.xlu0 %1114
      %v1116 = vmax.f32 %v1040, %v1041
      %1117 = vmax.xlane.f32.xlu0 %v1116
      %v1118 = vpop.xlane.xlu0 %1117
      %v1119 = vmax.f32 %v1042, %v1043
      %1120 = vmax.xlane.f32.xlu0 %v1119
      %v1121 = vpop.xlane.xlu0 %1120
      %v1122 = vmax.f32 %v1044, %v1045
      %1123 = vmax.xlane.f32.xlu0 %v1122
      %v1124 = vpop.xlane.xlu0 %1123
      %v1125 = vmax.f32 %v1046, %v1047
      %1126 = vmax.xlane.f32.xlu0 %v1125
      %v1127 = vpop.xlane.xlu0 %1126
      %v1128 = vmax.f32 %v1048, %v1049
      %1129 = vmax.xlane.f32.xlu0 %v1128
      %v1130 = vpop.xlane.xlu0 %1129
      %v1131 = vmax.f32 %v1050, %v1051
      %1132 = vmax.xlane.f32.xlu0 %v1131
      %v1133 = vpop.xlane.xlu0 %1132
      %v1134 = vmax.f32 %v1052, %v1053
      %1135 = vmax.xlane.f32.xlu0 %v1134
      %v1136 = vpop.xlane.xlu0 %1135
      %v1137 = vmax.f32 %v1054, %v1055
      %1138 = vmax.xlane.f32.xlu0 %v1137
      %v1139 = vpop.xlane.xlu0 %1138
      %v1140 = vmax.f32 %v1056, %v1057
      %1141 = vmax.xlane.f32.xlu0 %v1140
      %v1142 = vpop.xlane.xlu0 %1141
      %v1143 = vmax.f32 %v1058, %v1059
      %1144 = vmax.xlane.f32.xlu0 %v1143
      %v1145 = vpop.xlane.xlu0 %1144
      %v1146 = vmax.f32 %v1060, %v1061
      %1147 = vmax.xlane.f32.xlu0 %v1146
      %v1148 = vpop.xlane.xlu0 %1147
      %v1149 = vmax.f32 %v1062, %v1063
      %1150 = vmax.xlane.f32.xlu0 %v1149
      %v1151 = vpop.xlane.xlu0 %1150
      %v1152 = vmax.f32 %v1064, %v1065
      %1153 = vmax.xlane.f32.xlu0 %v1152
      %v1154 = vpop.xlane.xlu0 %1153
      %v1155 = vmax.f32 %v1066, %v1067
      %1156 = vmax.xlane.f32.xlu0 %v1155
      %v1157 = vpop.xlane.xlu0 %1156
      %v1158 = vmax.f32 %v1068, %v1069
      %1159 = vmax.xlane.f32.xlu0 %v1158
      %v1160 = vpop.xlane.xlu0 %1159
      %v1161 = vmax.f32 %v1070, %v1071
      %1162 = vmax.xlane.f32.xlu0 %v1161
      %v1163 = vpop.xlane.xlu0 %1162
      %v1164 = vmax.f32 %v1072, %v1073
      %1165 = vmax.xlane.f32.xlu0 %v1164
      %v1166 = vpop.xlane.xlu0 %1165
      %v1167 = vmax.f32 %v1074, %v1075
      %1168 = vmax.xlane.f32.xlu0 %v1167
      %v1169 = vpop.xlane.xlu0 %1168
      %v1170 = vmax.f32 %v1076, %v1077
      %1171 = vmax.xlane.f32.xlu0 %v1170
      %v1172 = vpop.xlane.xlu0 %1171
      %v1173 = vmax.f32 %v1078, %v1079
      %1174 = vmax.xlane.f32.xlu0 %v1173
      %v1175 = vpop.xlane.xlu0 %1174
      %v1176 = vld [vmem:[#allocation2] sm:$0xff]
      %v1177 = vld [vmem:[#allocation2 + $0x8] sm:$0xff]
      %v1178 = vld [vmem:[#allocation2 + $0x10] sm:$0xff]
      %v1179 = vld [vmem:[#allocation2 + $0x18] sm:$0xff]
      %v1180 = vld [vmem:[#allocation2 + $0x20] sm:$0xff]
      %v1181 = vld [vmem:[#allocation2 + $0x28] sm:$0xff]
      %v1182 = vld [vmem:[#allocation2 + $0x30] sm:$0xff]
      %v1183 = vld [vmem:[#allocation2 + $0x38] sm:$0xff]
      %v1184 = vld [vmem:[#allocation2 + $0x40] sm:$0xff]
      %v1185 = vld [vmem:[#allocation2 + $0x48] sm:$0xff]
      %v1186 = vld [vmem:[#allocation2 + $0x50] sm:$0xff]
      %v1187 = vld [vmem:[#allocation2 + $0x58] sm:$0xff]
      %v1188 = vld [vmem:[#allocation2 + $0x60] sm:$0xff]
      %v1189 = vld [vmem:[#allocation2 + $0x68] sm:$0xff]
      %v1190 = vld [vmem:[#allocation2 + $0x70] sm:$0xff]
      %v1191 = vld [vmem:[#allocation2 + $0x78] sm:$0xff]
      %v1192 = vld [vmem:[#allocation2 + $0x80] sm:$0xff]
      %v1193 = vld [vmem:[#allocation2 + $0x88] sm:$0xff]
      %v1194 = vld [vmem:[#allocation2 + $0x90] sm:$0xff]
      %v1195 = vld [vmem:[#allocation2 + $0x98] sm:$0xff]
      %v1196 = vld [vmem:[#allocation2 + $0xa0] sm:$0xff]
      %v1197 = vld [vmem:[#allocation2 + $0xa8] sm:$0xff]
      %v1198 = vld [vmem:[#allocation2 + $0xb0] sm:$0xff]
      %v1199 = vld [vmem:[#allocation2 + $0xb8] sm:$0xff]
      %v1200 = vld [vmem:[#allocation2 + $0xc0] sm:$0xff]
      %v1201 = vld [vmem:[#allocation2 + $0xc8] sm:$0xff]
      %v1202 = vld [vmem:[#allocation2 + $0xd0] sm:$0xff]
      %v1203 = vld [vmem:[#allocation2 + $0xd8] sm:$0xff]
      %v1204 = vld [vmem:[#allocation2 + $0xe0] sm:$0xff]
      %v1205 = vld [vmem:[#allocation2 + $0xe8] sm:$0xff]
      %v1206 = vld [vmem:[#allocation2 + $0xf0] sm:$0xff]
      %v1207 = vld [vmem:[#allocation2 + $0xf8] sm:$0xff]
      %v1208 = vmax.f32 %v1176, %v1082
      %v1209 = vmax.f32 %v1177, %v1085
      %v1210 = vmax.f32 %v1178, %v1088
      %v1211 = vmax.f32 %v1179, %v1091
      %v1212 = vmax.f32 %v1180, %v1094
      %v1213 = vmax.f32 %v1181, %v1097
      %v1214 = vmax.f32 %v1182, %v1100
      %v1215 = vmax.f32 %v1183, %v1103
      %v1216 = vmax.f32 %v1184, %v1106
      %v1217 = vmax.f32 %v1185, %v1109
      %v1218 = vmax.f32 %v1186, %v1112
      %v1219 = vmax.f32 %v1187, %v1115
      %v1220 = vmax.f32 %v1188, %v1118
      %v1221 = vmax.f32 %v1189, %v1121
      %v1222 = vmax.f32 %v1190, %v1124
      %v1223 = vmax.f32 %v1191, %v1127
      %v1224 = vmax.f32 %v1192, %v1130
      %v1225 = vmax.f32 %v1193, %v1133
      %v1226 = vmax.f32 %v1194, %v1136
      %v1227 = vmax.f32 %v1195, %v1139
      %v1228 = vmax.f32 %v1196, %v1142
      %v1229 = vmax.f32 %v1197, %v1145
      %v1230 = vmax.f32 %v1198, %v1148
      %v1231 = vmax.f32 %v1199, %v1151
      %v1232 = vmax.f32 %v1200, %v1154
      %v1233 = vmax.f32 %v1201, %v1157
      %v1234 = vmax.f32 %v1202, %v1160
      %v1235 = vmax.f32 %v1203, %v1163
      %v1236 = vmax.f32 %v1204, %v1166
      %v1237 = vmax.f32 %v1205, %v1169
      %v1238 = vmax.f32 %v1206, %v1172
      %v1239 = vmax.f32 %v1207, %v1175
      %vm1240 = vcmask 7168
      %1241 = vst.msk [vmem:[#allocation2] sm:$0xff] %vm1240, %v1208
      %1242 = vst.msk [vmem:[#allocation2 + $0x8] sm:$0xff] %vm1240, %v1209
      %1243 = vst.msk [vmem:[#allocation2 + $0x10] sm:$0xff] %vm1240, %v1210
      %1244 = vst.msk [vmem:[#allocation2 + $0x18] sm:$0xff] %vm1240, %v1211
      %1245 = vst.msk [vmem:[#allocation2 + $0x20] sm:$0xff] %vm1240, %v1212
      %1246 = vst.msk [vmem:[#allocation2 + $0x28] sm:$0xff] %vm1240, %v1213
      %1247 = vst.msk [vmem:[#allocation2 + $0x30] sm:$0xff] %vm1240, %v1214
      %1248 = vst.msk [vmem:[#allocation2 + $0x38] sm:$0xff] %vm1240, %v1215
      %1249 = vst.msk [vmem:[#allocation2 + $0x40] sm:$0xff] %vm1240, %v1216
      %1250 = vst.msk [vmem:[#allocation2 + $0x48] sm:$0xff] %vm1240, %v1217
      %1251 = vst.msk [vmem:[#allocation2 + $0x50] sm:$0xff] %vm1240, %v1218
      %1252 = vst.msk [vmem:[#allocation2 + $0x58] sm:$0xff] %vm1240, %v1219
      %1253 = vst.msk [vmem:[#allocation2 + $0x60] sm:$0xff] %vm1240, %v1220
      %1254 = vst.msk [vmem:[#allocation2 + $0x68] sm:$0xff] %vm1240, %v1221
      %1255 = vst.msk [vmem:[#allocation2 + $0x70] sm:$0xff] %vm1240, %v1222
      %1256 = vst.msk [vmem:[#allocation2 + $0x78] sm:$0xff] %vm1240, %v1223
      %1257 = vst.msk [vmem:[#allocation2 + $0x80] sm:$0xff] %vm1240, %v1224
      %1258 = vst.msk [vmem:[#allocation2 + $0x88] sm:$0xff] %vm1240, %v1225
      %1259 = vst.msk [vmem:[#allocation2 + $0x90] sm:$0xff] %vm1240, %v1226
      %1260 = vst.msk [vmem:[#allocation2 + $0x98] sm:$0xff] %vm1240, %v1227
      %1261 = vst.msk [vmem:[#allocation2 + $0xa0] sm:$0xff] %vm1240, %v1228
      %1262 = vst.msk [vmem:[#allocation2 + $0xa8] sm:$0xff] %vm1240, %v1229
      %1263 = vst.msk [vmem:[#allocation2 + $0xb0] sm:$0xff] %vm1240, %v1230
      %1264 = vst.msk [vmem:[#allocation2 + $0xb8] sm:$0xff] %vm1240, %v1231
      %1265 = vst.msk [vmem:[#allocation2 + $0xc0] sm:$0xff] %vm1240, %v1232
      %1266 = vst.msk [vmem:[#allocation2 + $0xc8] sm:$0xff] %vm1240, %v1233
      %1267 = vst.msk [vmem:[#allocation2 + $0xd0] sm:$0xff] %vm1240, %v1234
      %1268 = vst.msk [vmem:[#allocation2 + $0xd8] sm:$0xff] %vm1240, %v1235
      %1269 = vst.msk [vmem:[#allocation2 + $0xe0] sm:$0xff] %vm1240, %v1236
      %1270 = vst.msk [vmem:[#allocation2 + $0xe8] sm:$0xff] %vm1240, %v1237
      %1271 = vst.msk [vmem:[#allocation2 + $0xf0] sm:$0xff] %vm1240, %v1238
      %1272 = vst.msk [vmem:[#allocation2 + $0xf8] sm:$0xff] %vm1240, %v1239
      // Predicated region
      $region33: #{idmrf_loss.3} parent=27 // pred_check
        %p1273 = pneg %p189
      $region34: #{idmrf_loss.3} parent=27 // pred_check_branch
        %1275 = sbr.rel (%p1273) target = $region36
      $region35: #{idmrf_loss.3} parent=27 // pred_region
        %v1276 = vld [vmem:[#allocation2] sm:$0xff]
        %v1277 = vld [vmem:[#allocation2 + $0x8] sm:$0xff]
        %v1278 = vld [vmem:[#allocation2 + $0x10] sm:$0xff]
        %v1279 = vld [vmem:[#allocation2 + $0x18] sm:$0xff]
        %v1280 = vld [vmem:[#allocation2 + $0x20] sm:$0xff]
        %v1281 = vld [vmem:[#allocation2 + $0x28] sm:$0xff]
        %v1282 = vld [vmem:[#allocation2 + $0x30] sm:$0xff]
        %v1283 = vld [vmem:[#allocation2 + $0x38] sm:$0xff]
        %v1284 = vld [vmem:[#allocation2 + $0x40] sm:$0xff]
        %v1285 = vld [vmem:[#allocation2 + $0x48] sm:$0xff]
        %v1286 = vld [vmem:[#allocation2 + $0x50] sm:$0xff]
        %v1287 = vld [vmem:[#allocation2 + $0x58] sm:$0xff]
        %v1288 = vld [vmem:[#allocation2 + $0x60] sm:$0xff]
        %v1289 = vld [vmem:[#allocation2 + $0x68] sm:$0xff]
        %v1290 = vld [vmem:[#allocation2 + $0x70] sm:$0xff]
        %v1291 = vld [vmem:[#allocation2 + $0x78] sm:$0xff]
        %v1292 = vld [vmem:[#allocation2 + $0x80] sm:$0xff]
        %v1293 = vld [vmem:[#allocation2 + $0x88] sm:$0xff]
        %v1294 = vld [vmem:[#allocation2 + $0x90] sm:$0xff]
        %v1295 = vld [vmem:[#allocation2 + $0x98] sm:$0xff]
        %v1296 = vld [vmem:[#allocation2 + $0xa0] sm:$0xff]
        %v1297 = vld [vmem:[#allocation2 + $0xa8] sm:$0xff]
        %v1298 = vld [vmem:[#allocation2 + $0xb0] sm:$0xff]
        %v1299 = vld [vmem:[#allocation2 + $0xb8] sm:$0xff]
        %v1300 = vld [vmem:[#allocation2 + $0xc0] sm:$0xff]
        %v1301 = vld [vmem:[#allocation2 + $0xc8] sm:$0xff]
        %v1302 = vld [vmem:[#allocation2 + $0xd0] sm:$0xff]
        %v1303 = vld [vmem:[#allocation2 + $0xd8] sm:$0xff]
        %v1304 = vld [vmem:[#allocation2 + $0xe0] sm:$0xff]
        %v1305 = vld [vmem:[#allocation2 + $0xe8] sm:$0xff]
        %v1306 = vld [vmem:[#allocation2 + $0xf0] sm:$0xff]
        %v1307 = vld [vmem:[#allocation2 + $0xf8] sm:$0xff]
        %v1308 = vsel %vm1240, %v1276, 0.0
        %v1309 = vsel %vm1240, %v1277, 0.0
        %v1310 = vadd.f32 %v1308, %v1309
        %v1311 = vsel %vm1240, %v1278, 0.0
        %v1312 = vadd.f32 %v1310, %v1311
        %v1313 = vsel %vm1240, %v1279, 0.0
        %v1314 = vadd.f32 %v1312, %v1313
        %v1315 = vsel %vm1240, %v1280, 0.0
        %v1316 = vadd.f32 %v1314, %v1315
        %v1317 = vsel %vm1240, %v1281, 0.0
        %v1318 = vadd.f32 %v1316, %v1317
        %v1319 = vsel %vm1240, %v1282, 0.0
        %v1320 = vadd.f32 %v1318, %v1319
        %v1321 = vsel %vm1240, %v1283, 0.0
        %v1322 = vadd.f32 %v1320, %v1321
        %v1323 = vsel %vm1240, %v1284, 0.0
        %v1324 = vadd.f32 %v1322, %v1323
        %v1325 = vsel %vm1240, %v1285, 0.0
        %v1326 = vadd.f32 %v1324, %v1325
        %v1327 = vsel %vm1240, %v1286, 0.0
        %v1328 = vadd.f32 %v1326, %v1327
        %v1329 = vsel %vm1240, %v1287, 0.0
        %v1330 = vadd.f32 %v1328, %v1329
        %v1331 = vsel %vm1240, %v1288, 0.0
        %v1332 = vadd.f32 %v1330, %v1331
        %v1333 = vsel %vm1240, %v1289, 0.0
        %v1334 = vadd.f32 %v1332, %v1333
        %v1335 = vsel %vm1240, %v1290, 0.0
        %v1336 = vadd.f32 %v1334, %v1335
        %v1337 = vsel %vm1240, %v1291, 0.0
        %v1338 = vadd.f32 %v1336, %v1337
        %v1339 = vsel %vm1240, %v1292, 0.0
        %v1340 = vadd.f32 %v1338, %v1339
        %v1341 = vsel %vm1240, %v1293, 0.0
        %v1342 = vadd.f32 %v1340, %v1341
        %v1343 = vsel %vm1240, %v1294, 0.0
        %v1344 = vadd.f32 %v1342, %v1343
        %v1345 = vsel %vm1240, %v1295, 0.0
        %v1346 = vadd.f32 %v1344, %v1345
        %v1347 = vsel %vm1240, %v1296, 0.0
        %v1348 = vadd.f32 %v1346, %v1347
        %v1349 = vsel %vm1240, %v1297, 0.0
        %v1350 = vadd.f32 %v1348, %v1349
        %v1351 = vsel %vm1240, %v1298, 0.0
        %v1352 = vadd.f32 %v1350, %v1351
        %v1353 = vsel %vm1240, %v1299, 0.0
        %v1354 = vadd.f32 %v1352, %v1353
        %v1355 = vsel %vm1240, %v1300, 0.0
        %v1356 = vadd.f32 %v1354, %v1355
        %v1357 = vsel %vm1240, %v1301, 0.0
        %v1358 = vadd.f32 %v1356, %v1357
        %v1359 = vsel %vm1240, %v1302, 0.0
        %v1360 = vadd.f32 %v1358, %v1359
        %v1361 = vsel %vm1240, %v1303, 0.0
        %v1362 = vadd.f32 %v1360, %v1361
        %v1363 = vsel %vm1240, %v1304, 0.0
        %v1364 = vadd.f32 %v1362, %v1363
        %v1365 = vsel %vm1240, %v1305, 0.0
        %v1366 = vadd.f32 %v1364, %v1365
        %v1367 = vsel %vm1240, %v1306, 0.0
        %v1368 = vadd.f32 %v1366, %v1367
        %v1369 = vsel %vm1240, %v1307, 0.0
        %v1370 = vadd.f32 %v1368, %v1369
        %1371 = vadd.xlane.f32.xlu0 %v1370
        %v1372 = vpop.xlane.xlu0 %1371
        %v1373 = vrot.slane %v1372, 4
        %v1374 = vadd.f32 %v1372, %v1373
        %v1375 = vrot.slane %v1374, 2
        %v1376 = vadd.f32 %v1374, %v1375
        %v1377 = vrot.slane %v1376, 1
        %v1378 = vadd.f32 %v1376, %v1377
        %s1379 = vtos %v1378
        %v1380 = vrcp.pop 256.0
        %s1381 = vtos %v1380
        %s1382 = smul.f32 %s1379, %s1381
        %s1383 = smax.f32 %s1382, 1e-06
        %v1384 = vstv %s1383
        %v1385 = vlog2.pop %v1384
        %v1386 = vmul.f32 %v1385, 0.6931472
        %s1387 = vtos %v1386
        %s1388 = ssub.f32 0.0, %s1387
        %v1389 = vstv %s1388
        %vm1390 = vcmask 0
        %1391 = vst.msk [vmem:[%s187] sm:$0x1] %vm1390, %v1389
      $region36: #{idmrf_loss.3} parent=27 // pred_fallthru
        _
      %p1392 = scmp.lt.s32.totalorder %s17, 1
      %s1393 = scalar_select %p1392, %s17, 1
      %s1394 = scalar_lea.vmem %s2, %s1393
      // Predicated region
      $region37: #{idmrf_loss.3} parent=27 // pred_check
        %p1395 = pneg %p97
      $region38: #{idmrf_loss.3} parent=27 // pred_check_branch
        %1397 = sbr.rel (%p1395) target = $region40
      $region39: #{idmrf_loss.3} parent=27 // pred_region
        _
      $region40: #{idmrf_loss.3} parent=27 // pred_fallthru
        _
    $region28: #{idmrf_loss.3} parent=5 // pred_fallthru
      _
    %p1398 = scmp.le.s32.totalorder 2, %s8
    // Predicated region
    $region41: #{idmrf_loss.3} parent=5 // pred_check
      %p1399 = pneg %p1398
    $region42: #{idmrf_loss.3} parent=5 // pred_check_branch
      %1401 = sbr.rel (%p1399) target = $region44
    $region43: #{idmrf_loss.3} parent=5 // pred_region
      %s1402 = ssub.s32 %s8, 2
      // Predicated region
      $region45: #{idmrf_loss.3} parent=43 // pred_check
        %p1403 = pneg %p103
      $region46: #{idmrf_loss.3} parent=43 // pred_check_branch
        %1405 = sbr.rel (%p1403) target = $region48
      $region47: #{idmrf_loss.3} parent=43 // pred_region
        %p1406 = scmp.lt.s32.totalorder %s19, 1
        %s1407 = scalar_select %p1406, %s19, 1
        %s1408 = scalar_lea.vmem %s2, %s1407
      $region48: #{idmrf_loss.3} parent=43 // pred_fallthru
        _
    $region44: #{idmrf_loss.3} parent=5 // pred_fallthru
      _
  $region6: #{idmrf_loss.3} parent=0 // loop_footer
    %s12 = sadd.s32 1, %s8
  $region7: #{idmrf_loss.3} parent=0 // loop_footer_branch
    %7 = sbr.rel target = $region3
  $region8: #{idmrf_loss.3} parent=0 // loop_exit
    _

</llo_original>
